<compile_context>
chip_gen: v7x
topology: tpu7x:2x2x1
jax: 0.10.0
libtpu: 0.0.40
codegen_flags: <defaults>
</compile_context>

<pallas_src>
import functools
import math

import jax
import jax.numpy as jnp
from jax import lax
from jax.experimental import pallas as pl
from jax.experimental.pallas import tpu as pltpu


OUT_PAD = 128  # default lane-dense output width; real outputs are cols 0 and 1.


def _round_up(a, b):
    return (a + b - 1) // b * b


def _device_kind():
    try:
        return jax.devices()[0].device_kind.lower()
    except Exception:
        return ""


def _vmem_capacity_bytes(kind):
    try:
        return int(pltpu.get_tpu_info().vmem_capacity_bytes)
    except Exception:
        pass
    return (64 if "v7" in kind else 128) * 1024 * 1024


# ---------------------------------------------------------------------------
# Pallas kernel: fc1 -> relu -> fused heads -> relu -> block-diag matmul -> sigmoid
# ---------------------------------------------------------------------------
def inference_net_kernel(x_ref, w1_ref, b1_ref, wh_ref, bh_ref, wo_ref, bo_ref,
                         out_ref, *, precision):
    # In-kernel cast (hides under the matmul; no wrapper-side HBM pass over x).
    x = x_ref[...].astype(w1_ref.dtype)

    # h1 = relu(x @ w1 + b1)                                (bn, H), f32 epilogue
    h1 = jnp.dot(x, w1_ref[...], preferred_element_type=jnp.float32,
                 precision=precision)
    h1 = jnp.maximum(h1 + b1_ref[...], 0.0)

    # Both head hidden layers in ONE matmul:                (bn, 2H)
    hh = jnp.dot(h1.astype(wh_ref.dtype), wh_ref[...],
                 preferred_element_type=jnp.float32, precision=precision)
    hh = jnp.maximum(hh + bh_ref[...], 0.0)

    # Both logits via the block-diagonal, lane-dense output matmul: (bn, OUT_W)
    logits = jnp.dot(hh.astype(wo_ref.dtype), wo_ref[...],
                     preferred_element_type=jnp.float32,
                     precision=precision) + bo_ref[...]

    # exp lands on the EUP; avoids the explicit multi-op VPU divide of v1.
    out_ref[...] = jax.nn.sigmoid(logits)


# ---------------------------------------------------------------------------
# Parameter packing (hoisted out of the per-call hot path)
# ---------------------------------------------------------------------------
def pack_params(params, compute_dtype=jnp.float32, out_width=OUT_PAD):
    """Fuse the two heads and fold the scalar biases into a lane-dense layout."""
    H = params["w1"].shape[1]
    wh = jnp.concatenate([params["w31"], params["w41"]], axis=1)      # (H, 2H)
    bh = jnp.concatenate([params["b31"], params["b41"]], axis=1)      # (1, 2H)
    wo = jnp.zeros((2 * H, out_width), jnp.float32)
    wo = wo.at[:H, 0:1].set(params["w32"])                            # head 1 -> col 0
    wo = wo.at[H:, 1:2].set(params["w42"])                            # head 2 -> col 1
    bo = jnp.zeros((1, out_width), jnp.float32)
    bo = bo.at[0, 0].set(params["b32"][0, 0])
    bo = bo.at[0, 1].set(params["b42"][0, 0])
    return {
        "w1": params["w1"].astype(compute_dtype),
        "b1": params["b1"].astype(jnp.float32),
        "wh": wh.astype(compute_dtype),
        "bh": bh.astype(jnp.float32),
        "wo": wo.astype(compute_dtype),
        "bo": bo.astype(jnp.float32),
    }


# ---------------------------------------------------------------------------
# Tile selection + pallas_call wrapper
# ---------------------------------------------------------------------------
def _choose_bn(N, D, out_width, block_n, compute_itemsize, is_v7x, vmem_bytes):
    # bf16 packs 16 sublanes per vreg -> round bf16 tiles to 16 rows, f32 to 8.
    row_align = 16 if compute_itemsize < 4 else 8
    # Budget ~half of physical VMEM for the double-buffered batch tiles
    # (x tile is f32 in HBM, output tile is f32); weights are tiny and resident.
    per_row = 2 * (D * 4 + out_width * 4)
    bn_cap_vmem = max(row_align, (vmem_bytes // 2) // per_row)
    bn = min(block_n, bn_cap_vmem, _round_up(N, row_align))
    if is_v7x and N >= 2 * row_align:
        # 2 TensorCores/chip: keep at least two "parallel" grid steps.
        bn = min(bn, _round_up(pl.cdiv(N, 2), row_align))
    return max(row_align, _round_up(bn, row_align))


def _forward(x, packed, *, block_n, out_width, is_v7x, vmem_bytes, precision):
    N, D = x.shape
    H = packed["w1"].shape[1]
    itemsize = jnp.dtype(packed["w1"].dtype).itemsize

    bn = _choose_bn(N, D, out_width, block_n, itemsize, is_v7x, vmem_bytes)
    grid = (pl.cdiv(N, bn),)   # partial last block; OOB rows are masked on store

    def full(shape):
        # Whole weight/bias array, same block every grid step -> VMEM-resident.
        # (At H=32 these are tiny; pipeline_mode=pl.Buffered(1) would only
        #  matter if H/D are scaled up under the v7x 64 MiB budget.)
        return pl.BlockSpec(shape, lambda i: (0, 0))

    in_specs = [
        pl.BlockSpec((bn, D), lambda i: (i, 0)),         # x (batch-tiled)
        full((D, H)), full((1, H)),                      # w1, b1
        full((H, 2 * H)), full((1, 2 * H)),              # wh, bh (fused heads)
        full((2 * H, out_width)), full((1, out_width)),  # wo, bo (block-diag)
    ]
    out_spec = pl.BlockSpec((bn, out_width), lambda i: (i, 0))

    weight_bytes = ((D * H + H * 2 * H + 2 * H * out_width) * itemsize
                    + (H + 2 * H + out_width) * 4)
    flops = 2 * N * (D * H + H * 2 * H + 2 * H * out_width)
    bytes_accessed = N * D * 4 + weight_bytes + N * out_width * 4
    cost = pl.CostEstimate(flops=flops, transcendentals=N * out_width,
                           bytes_accessed=bytes_accessed)

    # Explicit VMEM limit with headroom below the per-generation physical size.
    est_vmem = 2 * bn * (D * 4 + out_width * 4) + 2 * weight_bytes + (1 << 20)
    vmem_limit = int(min(vmem_bytes * 3 // 4, max(32 << 20, 2 * est_vmem)))

    kernel = functools.partial(inference_net_kernel, precision=precision)
    out = pl.pallas_call(
        kernel,
        out_shape=jax.ShapeDtypeStruct((N, out_width), jnp.float32),
        grid=grid,
        in_specs=in_specs,
        out_specs=out_spec,
        compiler_params=pltpu.CompilerParams(
            dimension_semantics=("parallel",),
            vmem_limit_bytes=vmem_limit),
        cost_estimate=cost,
    )(x, packed["w1"], packed["b1"], packed["wh"], packed["bh"],
      packed["wo"], packed["bo"])

    # Real outputs live in lanes 0 (head 1) and 1 (head 2).
    return out[:, :2]


def make_inference_net_deep(params, *, k=5, block_n=4096, compute_dtype=None,
                            out_width=OUT_PAD):
    """Build a jitted InferenceNetDeep forward (eval semantics).

    compute_dtype=None -> bf16 matmul inputs on v6e/v7x (bf16-native MXU),
    f32 elsewhere.  Epilogue is always f32.
    """
    # The kernel elides self.layers: only its last element (a Dropout, identity
    # at eval) affects the output, which requires k - 3 >= 1.
    assert k - 3 >= 1, (
        "kernel assumes the last element of self.layers is a Dropout (k >= 4)")

    kind = _device_kind()
    is_v7x = "v7" in kind
    vmem_bytes = _vmem_capacity_bytes(kind)
    if compute_dtype is None:
        compute_dtype = (jnp.bfloat16 if ("v6" in kind or "v7" in kind)
                         else jnp.float32)
    precision = (lax.Precision.HIGHEST
                 if jnp.dtype(compute_dtype) == jnp.float32 else None)

    packed = pack_params(params, compute_dtype, out_width)  # packed ONCE

    @jax.jit
    def fwd(x):
        return _forward(x, packed, block_n=block_n, out_width=out_width,
                        is_v7x=is_v7x, vmem_bytes=vmem_bytes,
                        precision=precision)

    return fwd


# ---------------------------------------------------------------------------
# Deterministic parameter init (xavier_uniform weights, zero biases)
# ---------------------------------------------------------------------------
def xavier_uniform(key, fan_in, fan_out):
    a = math.sqrt(6.0 / (fan_in + fan_out))
    # Stored (in, out) so kernels do x @ W (equivalent to torch's x @ W.T).
    return jax.random.uniform(key, (fan_in, fan_out), jnp.float32,
                              minval=-a, maxval=a)


def init_params(key, input_dim, h_dim, k):
    n_hidden = max(k - 3, 0)
    keys = jax.random.split(key, 5 + max(n_hidden, 1))
    return {
        "w1": xavier_uniform(keys[0], input_dim, h_dim),
        "b1": jnp.zeros((1, h_dim), jnp.float32),
        "w31": xavier_uniform(keys[1], h_dim, h_dim),
        "b31": jnp.zeros((1, h_dim), jnp.float32),
        "w32": xavier_uniform(keys[2], h_dim, 1),
        "b32": jnp.zeros((1, 1), jnp.float32),
        "w41": xavier_uniform(keys[3], h_dim, h_dim),
        "b41": jnp.zeros((1, h_dim), jnp.float32),
        "w42": xavier_uniform(keys[4], h_dim, 1),
        "b42": jnp.zeros((1, 1), jnp.float32),
        # Hidden layers of self.layers (dead compute in the PyTorch forward,
        # kept so the reference can run the loop literally).
        "hidden_ws": [xavier_uniform(keys[5 + i], h_dim, h_dim)
                      for i in range(n_hidden)],
        "hidden_bs": [jnp.zeros((1, h_dim), jnp.float32)
                      for _ in range(n_hidden)],
    }


# Pure-JAX reference: literal transcription of the PyTorch forward (eval mode).
def reference_forward(x, p, k):
    h1 = jnp.maximum(x @ p["w1"] + p["b1"], 0.0)
    feat = x
    for wi, bi in zip(p["hidden_ws"], p["hidden_bs"]):
        feat = jnp.maximum(h1, 0.0) @ wi + bi     # x = Linear(relu(h1))
        feat = jnp.maximum(h1, 0.0)               # x = Dropout(relu(h1)) == relu(h1)
    h31 = jnp.maximum(feat @ p["w31"] + p["b31"], 0.0)
    y1 = jax.nn.sigmoid(h31 @ p["w32"] + p["b32"])
    h41 = jnp.maximum(feat @ p["w41"] + p["b41"], 0.0)
    y2 = jax.nn.sigmoid(h41 @ p["w42"] + p["b42"])
    return jnp.concatenate([y1, y2], axis=1)


if __name__ == "__main__":
    # Shapes consistent with InferenceNetDeep(input_dim=16, h_dim=32,
    # flag_dropout=False, k=5), batch N=16.
    N, input_dim, h_dim, k = 16, 16, 32, 5

    key = jax.random.PRNGKey(0)
    kx, kp = jax.random.split(key)
    x = jax.random.normal(kx, (N, input_dim), jnp.float32)
    params = init_params(kp, input_dim, h_dim, k)
    ref = reference_forward(x, params, k)

    # f32 matmul path (precision=HIGHEST) — tight tolerance.
    fwd_f32 = make_inference_net_deep(params, k=k, compute_dtype=jnp.float32)
    out = jax.block_until_ready(fwd_f32(x))
    assert out.shape == (N, 2), out.shape
    assert jnp.allclose(out, ref, atol=1e-5, rtol=1e-5), (
        f"max abs err (f32) = {jnp.max(jnp.abs(out - ref))}")

    # Partial last block (no wrapper padding): batch not a multiple of the tile.
    n_odd = 13
    out_odd = jax.block_until_ready(fwd_f32(x[:n_odd]))
    assert out_odd.shape == (n_odd, 2), out_odd.shape
    assert jnp.allclose(out_odd, ref[:n_odd], atol=1e-5, rtol=1e-5), (
        f"max abs err (partial block) = {jnp.max(jnp.abs(out_odd - ref[:n_odd]))}")

    # bf16 matmul inputs (v6e/v7x default), f32 epilogue — loose tolerance.
    fwd_bf16 = make_inference_net_deep(params, k=k, compute_dtype=jnp.bfloat16)
    out_bf16 = jax.block_until_ready(fwd_bf16(x))
    assert jnp.allclose(out_bf16, ref, atol=2e-2, rtol=2e-2), (
        f"max abs err (bf16) = {jnp.max(jnp.abs(out_bf16 - ref))}")

    # Auto compute dtype (bf16 on v6e/v7x, f32 otherwise).
    fwd_auto = make_inference_net_deep(params, k=k)
    out_auto = jax.block_until_ready(fwd_auto(x))
    assert jnp.allclose(out_auto, ref, atol=2e-2, rtol=2e-2), (
        f"max abs err (auto) = {jnp.max(jnp.abs(out_auto - ref))}")

    print("KERNEL_OK")
</pallas_src>

<mosaic_0001>
module attributes {stable_mosaic.version = 11 : i64} {
  func.func @inference_net_kernel(%arg0: i32, %arg1: memref<16x16xf32, #tpu.memory_space<vmem>>, %arg2: memref<16x32xf32, #tpu.memory_space<vmem>>, %arg3: memref<1x32xf32, #tpu.memory_space<vmem>>, %arg4: memref<32x64xf32, #tpu.memory_space<vmem>>, %arg5: memref<1x64xf32, #tpu.memory_space<vmem>>, %arg6: memref<64x128xf32, #tpu.memory_space<vmem>>, %arg7: memref<1x128xf32, #tpu.memory_space<vmem>>, %arg8: memref<16x128xf32, #tpu.memory_space<vmem>>) attributes {dimension_semantics = [#tpu.dimension_semantics<parallel>], iteration_bounds = array<i64: 1>, scalar_prefetch = 0 : i64, scratch_operands = 0 : i64, tpu.core_type = #tpu.core_type<tc>, window_params = [{transform_indices = @transform_0, window_bounds = array<i64: 16, 16>}, {pipeline_mode = #tpu.pipeline_mode<synchronous>, transform_indices = @transform_1, window_bounds = array<i64: 16, 32>}, {pipeline_mode = #tpu.pipeline_mode<synchronous>, transform_indices = @transform_2, window_bounds = array<i64: 1, 32>}, {pipeline_mode = #tpu.pipeline_mode<synchronous>, transform_indices = @transform_3, window_bounds = array<i64: 32, 64>}, {pipeline_mode = #tpu.pipeline_mode<synchronous>, transform_indices = @transform_4, window_bounds = array<i64: 1, 64>}, {pipeline_mode = #tpu.pipeline_mode<synchronous>, transform_indices = @transform_5, window_bounds = array<i64: 64, 128>}, {pipeline_mode = #tpu.pipeline_mode<synchronous>, transform_indices = @transform_6, window_bounds = array<i64: 1, 128>}, {transform_indices = @transform_7, window_bounds = array<i64: 16, 128>}]} {
    %c0 = arith.constant 0 : index
    %c0_0 = arith.constant 0 : index
    %0 = vector.load %arg1[%c0, %c0_0] : memref<16x16xf32, #tpu.memory_space<vmem>>, vector<16x16xf32>
    %c0_1 = arith.constant 0 : index
    %c0_2 = arith.constant 0 : index
    %1 = vector.load %arg2[%c0_1, %c0_2] : memref<16x32xf32, #tpu.memory_space<vmem>>, vector<16x32xf32>
    %cst = arith.constant dense<0.000000e+00> : vector<16x32xf32>
    %2 = tpu.matmul %0, %1, %cst {dimension_numbers = #tpu.dot_dimension_numbers<[1], [0], [0], [1], [0, 0, 1, 1], [], []>, precision = #tpu.contract_precision<fp32>} : vector<16x16xf32>, vector<16x32xf32>, vector<16x32xf32> -> vector<16x32xf32>
    %c0_3 = arith.constant 0 : index
    %c0_4 = arith.constant 0 : index
    %3 = vector.load %arg3[%c0_3, %c0_4] : memref<1x32xf32, #tpu.memory_space<vmem>>, vector<1x32xf32>
    %4 = vector.broadcast %3 : vector<1x32xf32> to vector<16x32xf32>
    %5 = arith.addf %2, %4 : vector<16x32xf32>
    %cst_5 = arith.constant 0.000000e+00 : f32
    %6 = vector.broadcast %cst_5 : f32 to vector<16x32xf32>
    %7 = arith.maximumf %5, %6 : vector<16x32xf32>
    %c0_6 = arith.constant 0 : index
    %c0_7 = arith.constant 0 : index
    %8 = vector.load %arg4[%c0_6, %c0_7] : memref<32x64xf32, #tpu.memory_space<vmem>>, vector<32x64xf32>
    %cst_8 = arith.constant dense<0.000000e+00> : vector<16x64xf32>
    %9 = tpu.matmul %7, %8, %cst_8 {dimension_numbers = #tpu.dot_dimension_numbers<[1], [0], [0], [1], [0, 0, 1, 1], [], []>, precision = #tpu.contract_precision<fp32>} : vector<16x32xf32>, vector<32x64xf32>, vector<16x64xf32> -> vector<16x64xf32>
    %c0_9 = arith.constant 0 : index
    %c0_10 = arith.constant 0 : index
    %10 = vector.load %arg5[%c0_9, %c0_10] : memref<1x64xf32, #tpu.memory_space<vmem>>, vector<1x64xf32>
    %11 = vector.broadcast %10 : vector<1x64xf32> to vector<16x64xf32>
    %12 = arith.addf %9, %11 : vector<16x64xf32>
    %cst_11 = arith.constant 0.000000e+00 : f32
    %13 = vector.broadcast %cst_11 : f32 to vector<16x64xf32>
    %14 = arith.maximumf %12, %13 : vector<16x64xf32>
    %c0_12 = arith.constant 0 : index
    %c0_13 = arith.constant 0 : index
    %15 = vector.load %arg6[%c0_12, %c0_13] : memref<64x128xf32, #tpu.memory_space<vmem>>, vector<64x128xf32>
    %cst_14 = arith.constant dense<0.000000e+00> : vector<16x128xf32>
    %16 = tpu.matmul %14, %15, %cst_14 {dimension_numbers = #tpu.dot_dimension_numbers<[1], [0], [0], [1], [0, 0, 1, 1], [], []>, precision = #tpu.contract_precision<fp32>} : vector<16x64xf32>, vector<64x128xf32>, vector<16x128xf32> -> vector<16x128xf32>
    %c0_15 = arith.constant 0 : index
    %c0_16 = arith.constant 0 : index
    %17 = vector.load %arg7[%c0_15, %c0_16] : memref<1x128xf32, #tpu.memory_space<vmem>>, vector<1x128xf32>
    %18 = vector.broadcast %17 : vector<1x128xf32> to vector<16x128xf32>
    %19 = arith.addf %16, %18 : vector<16x128xf32>
    %20 = arith.negf %19 : vector<16x128xf32>
    %21 = math.exp %20 : vector<16x128xf32>
    %cst_17 = arith.constant 1.000000e+00 : f32
    %22 = vector.broadcast %cst_17 : f32 to vector<16x128xf32>
    %23 = arith.addf %22, %21 : vector<16x128xf32>
    %24 = arith.divf %22, %23 : vector<16x128xf32>
    %c0_18 = arith.constant 0 : index
    %c0_19 = arith.constant 0 : index
    %25 = vector.load %arg8[%c0_18, %c0_19] : memref<16x128xf32, #tpu.memory_space<vmem>>, vector<16x128xf32>
    tpu.vector_store %arg8[%c0_18, %c0_19], %24 {strides = array<i32>} : memref<16x128xf32, #tpu.memory_space<vmem>>, vector<16x128xf32>,
    return
  }
  func.func @transform_0(%arg0: i32) -> (i32, i32) {
    %c0_i32 = arith.constant 0 : i32
    %c0_i32_0 = arith.constant 0 : i32
    return %arg0, %c0_i32 : i32, i32
  }
  func.func @transform_1(%arg0: i32) -> (i32, i32) {
    %c0_i32 = arith.constant 0 : i32
    %c0_i32_0 = arith.constant 0 : i32
    %c0_i32_1 = arith.constant 0 : i32
    return %c0_i32, %c0_i32_0 : i32, i32
  }
  func.func @transform_2(%arg0: i32) -> (i32, i32) {
    %c0_i32 = arith.constant 0 : i32
    %c0_i32_0 = arith.constant 0 : i32
    %c0_i32_1 = arith.constant 0 : i32
    return %c0_i32, %c0_i32_0 : i32, i32
  }
  func.func @transform_3(%arg0: i32) -> (i32, i32) {
    %c0_i32 = arith.constant 0 : i32
    %c0_i32_0 = arith.constant 0 : i32
    %c0_i32_1 = arith.constant 0 : i32
    return %c0_i32, %c0_i32_0 : i32, i32
  }
  func.func @transform_4(%arg0: i32) -> (i32, i32) {
    %c0_i32 = arith.constant 0 : i32
    %c0_i32_0 = arith.constant 0 : i32
    %c0_i32_1 = arith.constant 0 : i32
    return %c0_i32, %c0_i32_0 : i32, i32
  }
  func.func @transform_5(%arg0: i32) -> (i32, i32) {
    %c0_i32 = arith.constant 0 : i32
    %c0_i32_0 = arith.constant 0 : i32
    %c0_i32_1 = arith.constant 0 : i32
    return %c0_i32, %c0_i32_0 : i32, i32
  }
  func.func @transform_6(%arg0: i32) -> (i32, i32) {
    %c0_i32 = arith.constant 0 : i32
    %c0_i32_0 = arith.constant 0 : i32
    %c0_i32_1 = arith.constant 0 : i32
    return %c0_i32, %c0_i32_0 : i32, i32
  }
  func.func @transform_7(%arg0: i32) -> (i32, i32) {
    %c0_i32 = arith.constant 0 : i32
    %c0_i32_0 = arith.constant 0 : i32
    return %arg0, %c0_i32 : i32, i32
  }
}

</mosaic_0001>

<llo_original>
// kernel: fwd.1
$region0: #{fwd.1}
  #allocation0 [shape = 'u32[]', space=smem, size = 0x4, offset = 0x4, fixed_abs, tag = 'smem constant byte address 0x4 - core index']
  #allocation1 [shape = 'u32[144,128]{1,0:T(1,128)}', space=vmem, size = 0x12000, scoped, tag = 'internal scratch']
  %s0 = inlined_call_operand.hbm [shape: f32[16,16], index: 0, kind: input, shape index: {}]
  %s1 = inlined_call_operand.vmem [shape: f32[16,32], index: 1, kind: input, shape index: {}]
  %s2 = inlined_call_operand.vmem [shape: f32[1,32], index: 2, kind: input, shape index: {}]
  %s3 = inlined_call_operand.hbm [shape: f32[32,64], index: 3, kind: input, shape index: {}]
  %s4 = inlined_call_operand.vmem [shape: f32[1,64], index: 4, kind: input, shape index: {}]
  %s5 = inlined_call_operand.hbm [shape: f32[64,128], index: 5, kind: input, shape index: {}]
  %s6 = inlined_call_operand.vmem [shape: f32[1,128], index: 6, kind: input, shape index: {}]
  %s7 = inlined_call_operand.vmem [shape: f32[16,128], index: 7, kind: output, shape index: {}]
  %s8 = sld [smem:[#allocation0]]
  $region50: #{fwd.1} parent=0
    _
  %s10 = ssub.s32 1, %s8
  %s11 = scalar_select 0, %s10, %s8
  $region1: #{fwd.1} parent=0
    #allocation2 [shape = 'u8[8192]{0}', space=vmem, size = 0x2000, scoped, tag = 'input window, operand 0, single buffered']
    #allocation3 [shape = 's32[1]{0}', space=sflag, size = 0x4, scoped, tag = 'scoped memory for fwd.1']
    #allocation4 [shape = 'u8[16384]{0}', space=vmem, size = 0x4000, scoped, tag = 'input window, operand 3, single buffered']
    #allocation5 [shape = 's32[1]{0}', space=sflag, size = 0x4, scoped, tag = 'scoped memory for fwd.1']
    #allocation6 [shape = 'u8[32768]{0}', space=vmem, size = 0x8000, scoped, tag = 'input window, operand 5, single buffered']
    %12 = vsyncpa [#allocation3], 0
    %13 = vsyncpa [#allocation5], 0
    // Predicated region
    $region2: #{fwd.1} parent=1 // pred_check
      _
    $region3: #{fwd.1} parent=1 // pred_check_branch
      %15 = sbr.rel (0) target = $region5
    $region4: #{fwd.1} parent=1 // pred_region
      %s17 = ssub.s32 256, 256
      %18 = vsyncadd [#allocation3], %s17
      %s19 = sshll.u32 [#allocation2], 4
      %s20 = int_to_ptr.vmem [resolvable:$true] %s19
      %25 = dma.hbm_to_vmem [thread:$0]  %s0, 256, %s20, [#allocation3], 128, 128, 8
    $region5: #{fwd.1} parent=1 // pred_fallthru
      _
    // Predicated region
    $region6: #{fwd.1} parent=1 // pred_check
      _
    $region7: #{fwd.1} parent=1 // pred_check_branch
      %27 = sbr.rel (0) target = $region9
    $region8: #{fwd.1} parent=1 // pred_region
      _
    $region9: #{fwd.1} parent=1 // pred_fallthru
      _
    // Predicated region
    $region10: #{fwd.1} parent=1 // pred_check
      _
    $region11: #{fwd.1} parent=1 // pred_check_branch
      %29 = sbr.rel (0) target = $region13
    $region12: #{fwd.1} parent=1 // pred_region
      _
    $region13: #{fwd.1} parent=1 // pred_fallthru
      _
    // Predicated region
    $region14: #{fwd.1} parent=1 // pred_check
      _
    $region15: #{fwd.1} parent=1 // pred_check_branch
      %31 = sbr.rel (0) target = $region17
    $region16: #{fwd.1} parent=1 // pred_region
      %s33 = ssub.s32 512, 512
      %34 = vsyncadd [#allocation5], %s33
      %s35 = sshll.u32 [#allocation4], 4
      %s36 = int_to_ptr.vmem [resolvable:$true] %s35
      %41 = dma.hbm_to_vmem [thread:$0]  %s3, 512, %s36, [#allocation5], 128, 128, 8
    $region17: #{fwd.1} parent=1 // pred_fallthru
      _
    // Predicated region
    $region18: #{fwd.1} parent=1 // pred_check
      _
    $region19: #{fwd.1} parent=1 // pred_check_branch
      %43 = sbr.rel (0) target = $region21
    $region20: #{fwd.1} parent=1 // pred_region
      _
    $region21: #{fwd.1} parent=1 // pred_fallthru
      _
    // Predicated region
    $region22: #{fwd.1} parent=1 // pred_check
      _
    $region23: #{fwd.1} parent=1 // pred_check_branch
      %45 = sbr.rel (0) target = $region25
    $region24: #{fwd.1} parent=1 // pred_region
      %s47 = ssub.s32 1024, 1024
      %48 = vsyncadd [#allocation5], %s47
      %s49 = sshll.u32 [#allocation6], 4
      %s50 = int_to_ptr.vmem [resolvable:$true] %s49
      %55 = dma.hbm_to_vmem [thread:$0]  %s5, 1024, %s50, [#allocation5], 128, 128, 8
    $region25: #{fwd.1} parent=1 // pred_fallthru
      _
    // Predicated region
    $region26: #{fwd.1} parent=1 // pred_check
      _
    $region27: #{fwd.1} parent=1 // pred_check_branch
      %57 = sbr.rel (0) target = $region29
    $region28: #{fwd.1} parent=1 // pred_region
      _
    $region29: #{fwd.1} parent=1 // pred_fallthru
      _
    // Predicated region
    $region30: #{fwd.1} parent=1 // pred_check
      _
    $region31: #{fwd.1} parent=1 // pred_check_branch
      %59 = sbr.rel (0) target = $region33
    $region32: #{fwd.1} parent=1 // pred_region
      %60 = dma.done [#allocation3], 256
    $region33: #{fwd.1} parent=1 // pred_fallthru
      _
    // Predicated region
    $region34: #{fwd.1} parent=1 // pred_check
      _
    $region35: #{fwd.1} parent=1 // pred_check_branch
      %62 = sbr.rel (0) target = $region37
    $region36: #{fwd.1} parent=1 // pred_region
      %63 = dma.done [#allocation5], 512
    $region37: #{fwd.1} parent=1 // pred_fallthru
      _
    // Predicated region
    $region38: #{fwd.1} parent=1 // pred_check
      _
    $region39: #{fwd.1} parent=1 // pred_check_branch
      %65 = sbr.rel (0) target = $region41
    $region40: #{fwd.1} parent=1 // pred_region
      %66 = dma.done [#allocation5], 1024
    $region41: #{fwd.1} parent=1 // pred_fallthru
      _
    %v67 = vld [vmem:[#allocation2] sm:$0xff]
    %v68 = vld [vmem:[#allocation2 + $0x8] sm:$0xff]
    %v69 = vld [vmem:[%s1] sm:$0xff]
    %v70 = vld [vmem:[%s1 + $0x8] sm:$0xff]
    %v71 = vld [vmem:[%s2] sm:$0x1]
    %v73 = vlaneseq
    %v74 = vshrl.u32 %v73, 7
    %v75 = vsub.s32 0, %v74
    %v76 = vrot.slane %v71, %v75
    %vm78 = vcmask 130048
    %v80 = vsel %vm78, %v67, 0
    %v83 = vsel %vm78, %v68, 0
    %85 = vmatprep.subr.mxu0 0.0
    %v86 = vand.u32 %v69, 4294901760
    %87 = vmatpush1.msra.mxu0 %v86
    %88 = vmatprep.subr.mxu0 0.0
    %v89 = vand.u32 %v70, 4294901760
    %90 = vmatpush1.msra.mxu0 %v89
    %91 = vmatprep.subr.mxu0 0.0
    %92 = vmatpush1.msra.mxu0 0.0
    %93 = vmatprep.subr.mxu0 0.0
    %94 = vmatpush1.msra.mxu0 0.0
    %95 = vmatprep.subr.mxu0 0.0
    %96 = vmatpush1.msra.mxu0 0.0
    %97 = vmatprep.subr.mxu0 0.0
    %98 = vmatpush1.msra.mxu0 0.0
    %99 = vmatprep.subr.mxu0 0.0
    %100 = vmatpush1.msra.mxu0 0.0
    %101 = vmatprep.subr.mxu0 0.0
    %102 = vmatpush1.msra.mxu0 0.0
    %103 = vmatprep.subr.mxu0 0.0
    %104 = vmatpush1.msra.mxu0 0.0
    %105 = vmatprep.subr.mxu0 0.0
    %106 = vmatpush1.msra.mxu0 0.0
    %107 = vmatprep.subr.mxu0 0.0
    %108 = vmatpush1.msra.mxu0 0.0
    %109 = vmatprep.subr.mxu0 0.0
    %110 = vmatpush1.msra.mxu0 0.0
    %111 = vmatprep.subr.mxu0 0.0
    %112 = vmatpush1.msra.mxu0 0.0
    %113 = vmatprep.subr.mxu0 0.0
    %114 = vmatpush1.msra.mxu0 0.0
    %115 = vmatprep.subr.mxu0 0.0
    %116 = vmatpush1.msra.mxu0 0.0
    %117 = vmatprep.subr.mxu0 0.0
    %118 = vmatpush1.msra.mxu0 0.0
    %119 = vmatprep.subr.mxu0 0.0
    %120 = vmatpush1.msra.mxu0 0.0
    %121 = vmatprep.subr.mxu0 0.0
    %122 = vmatpush1.msra.mxu0 0.0
    %123 = vmatprep.subr.mxu0 0.0
    %124 = vmatpush1.msra.mxu0 0.0
    %125 = vmatprep.subr.mxu0 0.0
    %126 = vmatpush1.msra.mxu0 0.0
    %127 = vmatprep.subr.mxu0 0.0
    %128 = vmatpush1.msra.mxu0 0.0
    %129 = vmatprep.subr.mxu0 0.0
    %130 = vmatpush1.msra.mxu0 0.0
    %131 = vmatprep.subr.mxu0 0.0
    %132 = vmatpush1.msra.mxu0 0.0
    %133 = vmatprep.subr.mxu0 0.0
    %134 = vmatpush1.msra.mxu0 0.0
    %135 = vmatprep.subr.mxu0 0.0
    %136 = vmatpush1.msra.mxu0 0.0
    %137 = vmatprep.subr.mxu0 0.0
    %138 = vmatpush1.msra.mxu0 0.0
    %139 = vmatprep.subr.mxu0 0.0
    %140 = vmatpush1.msra.mxu0 0.0
    %141 = vmatprep.subr.mxu0 0.0
    %142 = vmatpush1.msra.mxu0 0.0
    %143 = vmatprep.subr.mxu0 0.0
    %144 = vmatpush1.msra.mxu0 0.0
    %145 = vmatprep.subr.mxu0 0.0
    %146 = vmatpush1.msra.mxu0 0.0
    %147 = vmatprep.subr.mxu0 0.0
    %148 = vmatpush1.msra.mxu0 0.0
    %149 = vmatprep.subr.mxu0 0.0
    %150 = vmatpush1.msra.mxu0 0.0
    %151 = vmatprep.mubr.f32.mxu0 0.0
    %v152 = vand.u32 %v80, 4294901760
    %v153 = vsub.f32 %v80, %v152
    %v154 = vand.u32 %v153, 4294901760
    %v155 = vsub.f32 %v153, %v154
    %v156 = vand.u32 %v155, 4294901760
    %157 = vmatmul.mubr.f32.gmra.mrb[0].mxu0 %v156
    %v158 = vpop.f32.mrb[0].mxu0
    %v159 = vadd.f32 %v76, %v158
    %v160 = vpop.f32.mrb[0].mxu0
    %161 = vmatprep.mubr.f32.mxu0 0.0
    %v162 = vand.u32 %v83, 4294901760
    %v163 = vsub.f32 %v83, %v162
    %v164 = vand.u32 %v163, 4294901760
    %v165 = vsub.f32 %v163, %v164
    %v166 = vand.u32 %v165, 4294901760
    %167 = vmatmul.mubr.f32.gmra.mrb[0].mxu0 %v166
    %v168 = vpop.f32.mrb[0].mxu0
    %v169 = vadd.f32 %v76, %v168
    %v170 = vpop.f32.mrb[0].mxu0
    %171 = vdwg.mxu0
    %172 = vmatprep.subr.mxu0 0.0
    %v173 = vand.u32 %v69, 4294901760
    %v174 = vsub.f32 %v69, %v173
    %v175 = vand.u32 %v174, 4294901760
    %v176 = vsub.f32 %v174, %v175
    %v177 = vand.u32 %v176, 4294901760
    %178 = vmatpush1.msra.mxu0 %v177
    %179 = vmatprep.subr.mxu0 0.0
    %v180 = vand.u32 %v70, 4294901760
    %v181 = vsub.f32 %v70, %v180
    %v182 = vand.u32 %v181, 4294901760
    %v183 = vsub.f32 %v181, %v182
    %v184 = vand.u32 %v183, 4294901760
    %185 = vmatpush1.msra.mxu0 %v184
    %186 = vmatprep.subr.mxu0 0.0
    %187 = vmatpush1.msra.mxu0 0.0
    %188 = vmatprep.subr.mxu0 0.0
    %189 = vmatpush1.msra.mxu0 0.0
    %190 = vmatprep.subr.mxu0 0.0
    %191 = vmatpush1.msra.mxu0 0.0
    %192 = vmatprep.subr.mxu0 0.0
    %193 = vmatpush1.msra.mxu0 0.0
    %194 = vmatprep.subr.mxu0 0.0
    %195 = vmatpush1.msra.mxu0 0.0
    %196 = vmatprep.subr.mxu0 0.0
    %197 = vmatpush1.msra.mxu0 0.0
    %198 = vmatprep.subr.mxu0 0.0
    %199 = vmatpush1.msra.mxu0 0.0
    %200 = vmatprep.subr.mxu0 0.0
    %201 = vmatpush1.msra.mxu0 0.0
    %202 = vmatprep.subr.mxu0 0.0
    %203 = vmatpush1.msra.mxu0 0.0
    %204 = vmatprep.subr.mxu0 0.0
    %205 = vmatpush1.msra.mxu0 0.0
    %206 = vmatprep.subr.mxu0 0.0
    %207 = vmatpush1.msra.mxu0 0.0
    %208 = vmatprep.subr.mxu0 0.0
    %209 = vmatpush1.msra.mxu0 0.0
    %210 = vmatprep.subr.mxu0 0.0
    %211 = vmatpush1.msra.mxu0 0.0
    %212 = vmatprep.subr.mxu0 0.0
    %213 = vmatpush1.msra.mxu0 0.0
    %214 = vmatprep.subr.mxu0 0.0
    %215 = vmatpush1.msra.mxu0 0.0
    %216 = vmatprep.subr.mxu0 0.0
    %217 = vmatpush1.msra.mxu0 0.0
    %218 = vmatprep.subr.mxu0 0.0
    %219 = vmatpush1.msra.mxu0 0.0
    %220 = vmatprep.subr.mxu0 0.0
    %221 = vmatpush1.msra.mxu0 0.0
    %222 = vmatprep.subr.mxu0 0.0
    %223 = vmatpush1.msra.mxu0 0.0
    %224 = vmatprep.subr.mxu0 0.0
    %225 = vmatpush1.msra.mxu0 0.0
    %226 = vmatprep.subr.mxu0 0.0
    %227 = vmatpush1.msra.mxu0 0.0
    %228 = vmatprep.subr.mxu0 0.0
    %229 = vmatpush1.msra.mxu0 0.0
    %230 = vmatprep.subr.mxu0 0.0
    %231 = vmatpush1.msra.mxu0 0.0
    %232 = vmatprep.subr.mxu0 0.0
    %233 = vmatpush1.msra.mxu0 0.0
    %234 = vmatprep.subr.mxu0 0.0
    %235 = vmatpush1.msra.mxu0 0.0
    %236 = vmatprep.subr.mxu0 0.0
    %237 = vmatpush1.msra.mxu0 0.0
    %238 = vmatprep.subr.mxu0 0.0
    %239 = vmatpush1.msra.mxu0 0.0
    %240 = vmatprep.subr.mxu0 0.0
    %241 = vmatpush1.msra.mxu0 0.0
    %242 = vmatprep.subr.mxu0 0.0
    %243 = vmatpush1.msra.mxu0 0.0
    %244 = vmatprep.subr.mxu0 0.0
    %245 = vmatpush1.msra.mxu0 0.0
    %246 = vmatprep.mubr.f32.mxu0 0.0
    %v247 = vand.u32 %v80, 4294901760
    %248 = vmatmul.mubr.f32.gmra.mrb[0].mxu0 %v247
    %v249 = vpop.f32.mrb[0].mxu0
    %v250 = vadd.f32 %v159, %v249
    %v251 = vpop.f32.mrb[0].mxu0
    %252 = vmatprep.mubr.f32.mxu0 0.0
    %v253 = vand.u32 %v83, 4294901760
    %254 = vmatmul.mubr.f32.gmra.mrb[0].mxu0 %v253
    %v255 = vpop.f32.mrb[0].mxu0
    %v256 = vadd.f32 %v169, %v255
    %v257 = vpop.f32.mrb[0].mxu0
    %258 = vdwg.mxu0
    %259 = vmatprep.subr.mxu0 0.0
    %v260 = vand.u32 %v69, 4294901760
    %v261 = vsub.f32 %v69, %v260
    %262 = vmatpush1.msra.mxu0 %v261
    %263 = vmatprep.subr.mxu0 0.0
    %v264 = vand.u32 %v70, 4294901760
    %v265 = vsub.f32 %v70, %v264
    %266 = vmatpush1.msra.mxu0 %v265
    %267 = vmatprep.subr.mxu0 0.0
    %268 = vmatpush1.msra.mxu0 0.0
    %269 = vmatprep.subr.mxu0 0.0
    %270 = vmatpush1.msra.mxu0 0.0
    %271 = vmatprep.subr.mxu0 0.0
    %272 = vmatpush1.msra.mxu0 0.0
    %273 = vmatprep.subr.mxu0 0.0
    %274 = vmatpush1.msra.mxu0 0.0
    %275 = vmatprep.subr.mxu0 0.0
    %276 = vmatpush1.msra.mxu0 0.0
    %277 = vmatprep.subr.mxu0 0.0
    %278 = vmatpush1.msra.mxu0 0.0
    %279 = vmatprep.subr.mxu0 0.0
    %280 = vmatpush1.msra.mxu0 0.0
    %281 = vmatprep.subr.mxu0 0.0
    %282 = vmatpush1.msra.mxu0 0.0
    %283 = vmatprep.subr.mxu0 0.0
    %284 = vmatpush1.msra.mxu0 0.0
    %285 = vmatprep.subr.mxu0 0.0
    %286 = vmatpush1.msra.mxu0 0.0
    %287 = vmatprep.subr.mxu0 0.0
    %288 = vmatpush1.msra.mxu0 0.0
    %289 = vmatprep.subr.mxu0 0.0
    %290 = vmatpush1.msra.mxu0 0.0
    %291 = vmatprep.subr.mxu0 0.0
    %292 = vmatpush1.msra.mxu0 0.0
    %293 = vmatprep.subr.mxu0 0.0
    %294 = vmatpush1.msra.mxu0 0.0
    %295 = vmatprep.subr.mxu0 0.0
    %296 = vmatpush1.msra.mxu0 0.0
    %297 = vmatprep.subr.mxu0 0.0
    %298 = vmatpush1.msra.mxu0 0.0
    %299 = vmatprep.subr.mxu0 0.0
    %300 = vmatpush1.msra.mxu0 0.0
    %301 = vmatprep.subr.mxu0 0.0
    %302 = vmatpush1.msra.mxu0 0.0
    %303 = vmatprep.subr.mxu0 0.0
    %304 = vmatpush1.msra.mxu0 0.0
    %305 = vmatprep.subr.mxu0 0.0
    %306 = vmatpush1.msra.mxu0 0.0
    %307 = vmatprep.subr.mxu0 0.0
    %308 = vmatpush1.msra.mxu0 0.0
    %309 = vmatprep.subr.mxu0 0.0
    %310 = vmatpush1.msra.mxu0 0.0
    %311 = vmatprep.subr.mxu0 0.0
    %312 = vmatpush1.msra.mxu0 0.0
    %313 = vmatprep.subr.mxu0 0.0
    %314 = vmatpush1.msra.mxu0 0.0
    %315 = vmatprep.subr.mxu0 0.0
    %316 = vmatpush1.msra.mxu0 0.0
    %317 = vmatprep.subr.mxu0 0.0
    %318 = vmatpush1.msra.mxu0 0.0
    %319 = vmatprep.subr.mxu0 0.0
    %320 = vmatpush1.msra.mxu0 0.0
    %321 = vmatprep.subr.mxu0 0.0
    %322 = vmatpush1.msra.mxu0 0.0
    %323 = vmatprep.subr.mxu0 0.0
    %324 = vmatpush1.msra.mxu0 0.0
    %325 = vmatprep.subr.mxu0 0.0
    %326 = vmatpush1.msra.mxu0 0.0
    %327 = vmatprep.mubr.f32.mxu0 0.0
    %v328 = vand.u32 %v80, 4294901760
    %v329 = vsub.f32 %v80, %v328
    %330 = vmatmul.mubr.f32.gmra.mrb[0].mxu0 %v329
    %v331 = vpop.f32.mrb[0].mxu0
    %v332 = vadd.f32 %v250, %v331
    %v333 = vpop.f32.mrb[0].mxu0
    %334 = vmatprep.mubr.f32.mxu0 0.0
    %v335 = vand.u32 %v83, 4294901760
    %v336 = vsub.f32 %v83, %v335
    %337 = vmatmul.mubr.f32.gmra.mrb[0].mxu0 %v336
    %v338 = vpop.f32.mrb[0].mxu0
    %v339 = vadd.f32 %v256, %v338
    %v340 = vpop.f32.mrb[0].mxu0
    %341 = vdwg.mxu0
    %342 = vmatprep.subr.mxu0 0.0
    %v343 = vand.u32 %v69, 4294901760
    %344 = vmatpush1.msra.mxu0 %v343
    %345 = vmatprep.subr.mxu0 0.0
    %v346 = vand.u32 %v70, 4294901760
    %347 = vmatpush1.msra.mxu0 %v346
    %348 = vmatprep.subr.mxu0 0.0
    %349 = vmatpush1.msra.mxu0 0.0
    %350 = vmatprep.subr.mxu0 0.0
    %351 = vmatpush1.msra.mxu0 0.0
    %352 = vmatprep.subr.mxu0 0.0
    %353 = vmatpush1.msra.mxu0 0.0
    %354 = vmatprep.subr.mxu0 0.0
    %355 = vmatpush1.msra.mxu0 0.0
    %356 = vmatprep.subr.mxu0 0.0
    %357 = vmatpush1.msra.mxu0 0.0
    %358 = vmatprep.subr.mxu0 0.0
    %359 = vmatpush1.msra.mxu0 0.0
    %360 = vmatprep.subr.mxu0 0.0
    %361 = vmatpush1.msra.mxu0 0.0
    %362 = vmatprep.subr.mxu0 0.0
    %363 = vmatpush1.msra.mxu0 0.0
    %364 = vmatprep.subr.mxu0 0.0
    %365 = vmatpush1.msra.mxu0 0.0
    %366 = vmatprep.subr.mxu0 0.0
    %367 = vmatpush1.msra.mxu0 0.0
    %368 = vmatprep.subr.mxu0 0.0
    %369 = vmatpush1.msra.mxu0 0.0
    %370 = vmatprep.subr.mxu0 0.0
    %371 = vmatpush1.msra.mxu0 0.0
    %372 = vmatprep.subr.mxu0 0.0
    %373 = vmatpush1.msra.mxu0 0.0
    %374 = vmatprep.subr.mxu0 0.0
    %375 = vmatpush1.msra.mxu0 0.0
    %376 = vmatprep.subr.mxu0 0.0
    %377 = vmatpush1.msra.mxu0 0.0
    %378 = vmatprep.subr.mxu0 0.0
    %379 = vmatpush1.msra.mxu0 0.0
    %380 = vmatprep.subr.mxu0 0.0
    %381 = vmatpush1.msra.mxu0 0.0
    %382 = vmatprep.subr.mxu0 0.0
    %383 = vmatpush1.msra.mxu0 0.0
    %384 = vmatprep.subr.mxu0 0.0
    %385 = vmatpush1.msra.mxu0 0.0
    %386 = vmatprep.subr.mxu0 0.0
    %387 = vmatpush1.msra.mxu0 0.0
    %388 = vmatprep.subr.mxu0 0.0
    %389 = vmatpush1.msra.mxu0 0.0
    %390 = vmatprep.subr.mxu0 0.0
    %391 = vmatpush1.msra.mxu0 0.0
    %392 = vmatprep.subr.mxu0 0.0
    %393 = vmatpush1.msra.mxu0 0.0
    %394 = vmatprep.subr.mxu0 0.0
    %395 = vmatpush1.msra.mxu0 0.0
    %396 = vmatprep.subr.mxu0 0.0
    %397 = vmatpush1.msra.mxu0 0.0
    %398 = vmatprep.subr.mxu0 0.0
    %399 = vmatpush1.msra.mxu0 0.0
    %400 = vmatprep.subr.mxu0 0.0
    %401 = vmatpush1.msra.mxu0 0.0
    %402 = vmatprep.subr.mxu0 0.0
    %403 = vmatpush1.msra.mxu0 0.0
    %404 = vmatprep.subr.mxu0 0.0
    %405 = vmatpush1.msra.mxu0 0.0
    %406 = vmatprep.subr.mxu0 0.0
    %407 = vmatpush1.msra.mxu0 0.0
    %408 = vmatprep.mubr.f32.mxu0 0.0
    %v409 = vand.u32 %v80, 4294901760
    %v410 = vsub.f32 %v80, %v409
    %v411 = vand.u32 %v410, 4294901760
    %412 = vmatmul.mubr.f32.gmra.mrb[0].mxu0 %v411
    %v413 = vpop.f32.mrb[0].mxu0
    %v414 = vadd.f32 %v332, %v413
    %v415 = vpop.f32.mrb[0].mxu0
    %416 = vmatprep.mubr.f32.mxu0 0.0
    %v417 = vand.u32 %v83, 4294901760
    %v418 = vsub.f32 %v83, %v417
    %v419 = vand.u32 %v418, 4294901760
    %420 = vmatmul.mubr.f32.gmra.mrb[0].mxu0 %v419
    %v421 = vpop.f32.mrb[0].mxu0
    %v422 = vadd.f32 %v339, %v421
    %v423 = vpop.f32.mrb[0].mxu0
    %424 = vdwg.mxu0
    %425 = vmatprep.subr.mxu0 0.0
    %v426 = vand.u32 %v69, 4294901760
    %v427 = vsub.f32 %v69, %v426
    %v428 = vand.u32 %v427, 4294901760
    %429 = vmatpush1.msra.mxu0 %v428
    %430 = vmatprep.subr.mxu0 0.0
    %v431 = vand.u32 %v70, 4294901760
    %v432 = vsub.f32 %v70, %v431
    %v433 = vand.u32 %v432, 4294901760
    %434 = vmatpush1.msra.mxu0 %v433
    %435 = vmatprep.subr.mxu0 0.0
    %436 = vmatpush1.msra.mxu0 0.0
    %437 = vmatprep.subr.mxu0 0.0
    %438 = vmatpush1.msra.mxu0 0.0
    %439 = vmatprep.subr.mxu0 0.0
    %440 = vmatpush1.msra.mxu0 0.0
    %441 = vmatprep.subr.mxu0 0.0
    %442 = vmatpush1.msra.mxu0 0.0
    %443 = vmatprep.subr.mxu0 0.0
    %444 = vmatpush1.msra.mxu0 0.0
    %445 = vmatprep.subr.mxu0 0.0
    %446 = vmatpush1.msra.mxu0 0.0
    %447 = vmatprep.subr.mxu0 0.0
    %448 = vmatpush1.msra.mxu0 0.0
    %449 = vmatprep.subr.mxu0 0.0
    %450 = vmatpush1.msra.mxu0 0.0
    %451 = vmatprep.subr.mxu0 0.0
    %452 = vmatpush1.msra.mxu0 0.0
    %453 = vmatprep.subr.mxu0 0.0
    %454 = vmatpush1.msra.mxu0 0.0
    %455 = vmatprep.subr.mxu0 0.0
    %456 = vmatpush1.msra.mxu0 0.0
    %457 = vmatprep.subr.mxu0 0.0
    %458 = vmatpush1.msra.mxu0 0.0
    %459 = vmatprep.subr.mxu0 0.0
    %460 = vmatpush1.msra.mxu0 0.0
    %461 = vmatprep.subr.mxu0 0.0
    %462 = vmatpush1.msra.mxu0 0.0
    %463 = vmatprep.subr.mxu0 0.0
    %464 = vmatpush1.msra.mxu0 0.0
    %465 = vmatprep.subr.mxu0 0.0
    %466 = vmatpush1.msra.mxu0 0.0
    %467 = vmatprep.subr.mxu0 0.0
    %468 = vmatpush1.msra.mxu0 0.0
    %469 = vmatprep.subr.mxu0 0.0
    %470 = vmatpush1.msra.mxu0 0.0
    %471 = vmatprep.subr.mxu0 0.0
    %472 = vmatpush1.msra.mxu0 0.0
    %473 = vmatprep.subr.mxu0 0.0
    %474 = vmatpush1.msra.mxu0 0.0
    %475 = vmatprep.subr.mxu0 0.0
    %476 = vmatpush1.msra.mxu0 0.0
    %477 = vmatprep.subr.mxu0 0.0
    %478 = vmatpush1.msra.mxu0 0.0
    %479 = vmatprep.subr.mxu0 0.0
    %480 = vmatpush1.msra.mxu0 0.0
    %481 = vmatprep.subr.mxu0 0.0
    %482 = vmatpush1.msra.mxu0 0.0
    %483 = vmatprep.subr.mxu0 0.0
    %484 = vmatpush1.msra.mxu0 0.0
    %485 = vmatprep.subr.mxu0 0.0
    %486 = vmatpush1.msra.mxu0 0.0
    %487 = vmatprep.subr.mxu0 0.0
    %488 = vmatpush1.msra.mxu0 0.0
    %489 = vmatprep.subr.mxu0 0.0
    %490 = vmatpush1.msra.mxu0 0.0
    %491 = vmatprep.subr.mxu0 0.0
    %492 = vmatpush1.msra.mxu0 0.0
    %493 = vmatprep.subr.mxu0 0.0
    %494 = vmatpush1.msra.mxu0 0.0
    %495 = vmatprep.mubr.f32.mxu0 0.0
    %v496 = vand.u32 %v80, 4294901760
    %497 = vmatmul.mubr.f32.gmra.mrb[0].mxu0 %v496
    %v498 = vpop.f32.mrb[0].mxu0
    %v499 = vadd.f32 %v414, %v498
    %v500 = vpop.f32.mrb[0].mxu0
    %501 = vmatprep.mubr.f32.mxu0 0.0
    %v502 = vand.u32 %v83, 4294901760
    %503 = vmatmul.mubr.f32.gmra.mrb[0].mxu0 %v502
    %v504 = vpop.f32.mrb[0].mxu0
    %v505 = vadd.f32 %v422, %v504
    %v506 = vpop.f32.mrb[0].mxu0
    %507 = vdwg.mxu0
    %508 = vmatprep.subr.mxu0 0.0
    %v509 = vand.u32 %v69, 4294901760
    %510 = vmatpush1.msra.mxu0 %v509
    %511 = vmatprep.subr.mxu0 0.0
    %v512 = vand.u32 %v70, 4294901760
    %513 = vmatpush1.msra.mxu0 %v512
    %514 = vmatprep.subr.mxu0 0.0
    %515 = vmatpush1.msra.mxu0 0.0
    %516 = vmatprep.subr.mxu0 0.0
    %517 = vmatpush1.msra.mxu0 0.0
    %518 = vmatprep.subr.mxu0 0.0
    %519 = vmatpush1.msra.mxu0 0.0
    %520 = vmatprep.subr.mxu0 0.0
    %521 = vmatpush1.msra.mxu0 0.0
    %522 = vmatprep.subr.mxu0 0.0
    %523 = vmatpush1.msra.mxu0 0.0
    %524 = vmatprep.subr.mxu0 0.0
    %525 = vmatpush1.msra.mxu0 0.0
    %526 = vmatprep.subr.mxu0 0.0
    %527 = vmatpush1.msra.mxu0 0.0
    %528 = vmatprep.subr.mxu0 0.0
    %529 = vmatpush1.msra.mxu0 0.0
    %530 = vmatprep.subr.mxu0 0.0
    %531 = vmatpush1.msra.mxu0 0.0
    %532 = vmatprep.subr.mxu0 0.0
    %533 = vmatpush1.msra.mxu0 0.0
    %534 = vmatprep.subr.mxu0 0.0
    %535 = vmatpush1.msra.mxu0 0.0
    %536 = vmatprep.subr.mxu0 0.0
    %537 = vmatpush1.msra.mxu0 0.0
    %538 = vmatprep.subr.mxu0 0.0
    %539 = vmatpush1.msra.mxu0 0.0
    %540 = vmatprep.subr.mxu0 0.0
    %541 = vmatpush1.msra.mxu0 0.0
    %542 = vmatprep.subr.mxu0 0.0
    %543 = vmatpush1.msra.mxu0 0.0
    %544 = vmatprep.subr.mxu0 0.0
    %545 = vmatpush1.msra.mxu0 0.0
    %546 = vmatprep.subr.mxu0 0.0
    %547 = vmatpush1.msra.mxu0 0.0
    %548 = vmatprep.subr.mxu0 0.0
    %549 = vmatpush1.msra.mxu0 0.0
    %550 = vmatprep.subr.mxu0 0.0
    %551 = vmatpush1.msra.mxu0 0.0
    %552 = vmatprep.subr.mxu0 0.0
    %553 = vmatpush1.msra.mxu0 0.0
    %554 = vmatprep.subr.mxu0 0.0
    %555 = vmatpush1.msra.mxu0 0.0
    %556 = vmatprep.subr.mxu0 0.0
    %557 = vmatpush1.msra.mxu0 0.0
    %558 = vmatprep.subr.mxu0 0.0
    %559 = vmatpush1.msra.mxu0 0.0
    %560 = vmatprep.subr.mxu0 0.0
    %561 = vmatpush1.msra.mxu0 0.0
    %562 = vmatprep.subr.mxu0 0.0
    %563 = vmatpush1.msra.mxu0 0.0
    %564 = vmatprep.subr.mxu0 0.0
    %565 = vmatpush1.msra.mxu0 0.0
    %566 = vmatprep.subr.mxu0 0.0
    %567 = vmatpush1.msra.mxu0 0.0
    %568 = vmatprep.subr.mxu0 0.0
    %569 = vmatpush1.msra.mxu0 0.0
    %570 = vmatprep.subr.mxu0 0.0
    %571 = vmatpush1.msra.mxu0 0.0
    %572 = vmatprep.subr.mxu0 0.0
    %573 = vmatpush1.msra.mxu0 0.0
    %574 = vmatprep.mubr.f32.mxu0 0.0
    %v575 = vand.u32 %v80, 4294901760
    %576 = vmatmul.mubr.f32.gmra.mrb[0].mxu0 %v575
    %v577 = vpop.f32.mrb[0].mxu0
    %v578 = vadd.f32 %v499, %v577
    %v579 = vpop.f32.mrb[0].mxu0
    %580 = vmatprep.mubr.f32.mxu0 0.0
    %v581 = vand.u32 %v83, 4294901760
    %582 = vmatmul.mubr.f32.gmra.mrb[0].mxu0 %v581
    %v583 = vpop.f32.mrb[0].mxu0
    %v584 = vadd.f32 %v505, %v583
    %v585 = vpop.f32.mrb[0].mxu0
    %586 = vdwg.mxu0
    %v587 = vmax.f32 %v578, 0.0
    %v588 = vmax.f32 %v584, 0.0
    %v589 = vld [vmem:[#allocation4] sm:$0xff]
    %v590 = vld [vmem:[#allocation4 + $0x8] sm:$0xff]
    %v591 = vld [vmem:[#allocation4 + $0x10] sm:$0xff]
    %v592 = vld [vmem:[#allocation4 + $0x18] sm:$0xff]
    %v593 = vld [vmem:[%s4] sm:$0x1]
    %v595 = vlaneseq
    %v596 = vshrl.u32 %v595, 7
    %v597 = vsub.s32 0, %v596
    %v598 = vrot.slane %v593, %v597
    %vm600 = vcmask 261120
    %v602 = vsel %vm600, %v587, 0
    %v605 = vsel %vm600, %v588, 0
    %607 = vmatprep.subr.mxu0 0.0
    %v608 = vand.u32 %v589, 4294901760
    %609 = vmatpush1.msra.mxu0 %v608
    %610 = vmatprep.subr.mxu0 0.0
    %v611 = vand.u32 %v590, 4294901760
    %612 = vmatpush1.msra.mxu0 %v611
    %613 = vmatprep.subr.mxu0 0.0
    %v614 = vand.u32 %v591, 4294901760
    %615 = vmatpush1.msra.mxu0 %v614
    %616 = vmatprep.subr.mxu0 0.0
    %v617 = vand.u32 %v592, 4294901760
    %618 = vmatpush1.msra.mxu0 %v617
    %619 = vmatprep.subr.mxu0 0.0
    %620 = vmatpush1.msra.mxu0 0.0
    %621 = vmatprep.subr.mxu0 0.0
    %622 = vmatpush1.msra.mxu0 0.0
    %623 = vmatprep.subr.mxu0 0.0
    %624 = vmatpush1.msra.mxu0 0.0
    %625 = vmatprep.subr.mxu0 0.0
    %626 = vmatpush1.msra.mxu0 0.0
    %627 = vmatprep.subr.mxu0 0.0
    %628 = vmatpush1.msra.mxu0 0.0
    %629 = vmatprep.subr.mxu0 0.0
    %630 = vmatpush1.msra.mxu0 0.0
    %631 = vmatprep.subr.mxu0 0.0
    %632 = vmatpush1.msra.mxu0 0.0
    %633 = vmatprep.subr.mxu0 0.0
    %634 = vmatpush1.msra.mxu0 0.0
    %635 = vmatprep.subr.mxu0 0.0
    %636 = vmatpush1.msra.mxu0 0.0
    %637 = vmatprep.subr.mxu0 0.0
    %638 = vmatpush1.msra.mxu0 0.0
    %639 = vmatprep.subr.mxu0 0.0
    %640 = vmatpush1.msra.mxu0 0.0
    %641 = vmatprep.subr.mxu0 0.0
    %642 = vmatpush1.msra.mxu0 0.0
    %643 = vmatprep.subr.mxu0 0.0
    %644 = vmatpush1.msra.mxu0 0.0
    %645 = vmatprep.subr.mxu0 0.0
    %646 = vmatpush1.msra.mxu0 0.0
    %647 = vmatprep.subr.mxu0 0.0
    %648 = vmatpush1.msra.mxu0 0.0
    %649 = vmatprep.subr.mxu0 0.0
    %650 = vmatpush1.msra.mxu0 0.0
    %651 = vmatprep.subr.mxu0 0.0
    %652 = vmatpush1.msra.mxu0 0.0
    %653 = vmatprep.subr.mxu0 0.0
    %654 = vmatpush1.msra.mxu0 0.0
    %655 = vmatprep.subr.mxu0 0.0
    %656 = vmatpush1.msra.mxu0 0.0
    %657 = vmatprep.subr.mxu0 0.0
    %658 = vmatpush1.msra.mxu0 0.0
    %659 = vmatprep.subr.mxu0 0.0
    %660 = vmatpush1.msra.mxu0 0.0
    %661 = vmatprep.subr.mxu0 0.0
    %662 = vmatpush1.msra.mxu0 0.0
    %663 = vmatprep.subr.mxu0 0.0
    %664 = vmatpush1.msra.mxu0 0.0
    %665 = vmatprep.subr.mxu0 0.0
    %666 = vmatpush1.msra.mxu0 0.0
    %667 = vmatprep.subr.mxu0 0.0
    %668 = vmatpush1.msra.mxu0 0.0
    %669 = vmatprep.subr.mxu0 0.0
    %670 = vmatpush1.msra.mxu0 0.0
    %671 = vmatprep.subr.mxu0 0.0
    %672 = vmatpush1.msra.mxu0 0.0
    %673 = vmatprep.subr.mxu0 0.0
    %674 = vmatpush1.msra.mxu0 0.0
    %675 = vmatprep.mubr.f32.mxu0 0.0
    %v676 = vand.u32 %v602, 4294901760
    %v677 = vsub.f32 %v602, %v676
    %v678 = vand.u32 %v677, 4294901760
    %v679 = vsub.f32 %v677, %v678
    %v680 = vand.u32 %v679, 4294901760
    %681 = vmatmul.mubr.f32.gmra.mrb[0].mxu0 %v680
    %v682 = vpop.f32.mrb[0].mxu0
    %v683 = vadd.f32 %v598, %v682
    %v684 = vpop.f32.mrb[0].mxu0
    %685 = vmatprep.mubr.f32.mxu0 0.0
    %v686 = vand.u32 %v605, 4294901760
    %v687 = vsub.f32 %v605, %v686
    %v688 = vand.u32 %v687, 4294901760
    %v689 = vsub.f32 %v687, %v688
    %v690 = vand.u32 %v689, 4294901760
    %691 = vmatmul.mubr.f32.gmra.mrb[0].mxu0 %v690
    %v692 = vpop.f32.mrb[0].mxu0
    %v693 = vadd.f32 %v598, %v692
    %v694 = vpop.f32.mrb[0].mxu0
    %695 = vdwg.mxu0
    %696 = vmatprep.subr.mxu0 0.0
    %v697 = vand.u32 %v589, 4294901760
    %v698 = vsub.f32 %v589, %v697
    %v699 = vand.u32 %v698, 4294901760
    %v700 = vsub.f32 %v698, %v699
    %v701 = vand.u32 %v700, 4294901760
    %702 = vmatpush1.msra.mxu0 %v701
    %703 = vmatprep.subr.mxu0 0.0
    %v704 = vand.u32 %v590, 4294901760
    %v705 = vsub.f32 %v590, %v704
    %v706 = vand.u32 %v705, 4294901760
    %v707 = vsub.f32 %v705, %v706
    %v708 = vand.u32 %v707, 4294901760
    %709 = vmatpush1.msra.mxu0 %v708
    %710 = vmatprep.subr.mxu0 0.0
    %v711 = vand.u32 %v591, 4294901760
    %v712 = vsub.f32 %v591, %v711
    %v713 = vand.u32 %v712, 4294901760
    %v714 = vsub.f32 %v712, %v713
    %v715 = vand.u32 %v714, 4294901760
    %716 = vmatpush1.msra.mxu0 %v715
    %717 = vmatprep.subr.mxu0 0.0
    %v718 = vand.u32 %v592, 4294901760
    %v719 = vsub.f32 %v592, %v718
    %v720 = vand.u32 %v719, 4294901760
    %v721 = vsub.f32 %v719, %v720
    %v722 = vand.u32 %v721, 4294901760
    %723 = vmatpush1.msra.mxu0 %v722
    %724 = vmatprep.subr.mxu0 0.0
    %725 = vmatpush1.msra.mxu0 0.0
    %726 = vmatprep.subr.mxu0 0.0
    %727 = vmatpush1.msra.mxu0 0.0
    %728 = vmatprep.subr.mxu0 0.0
    %729 = vmatpush1.msra.mxu0 0.0
    %730 = vmatprep.subr.mxu0 0.0
    %731 = vmatpush1.msra.mxu0 0.0
    %732 = vmatprep.subr.mxu0 0.0
    %733 = vmatpush1.msra.mxu0 0.0
    %734 = vmatprep.subr.mxu0 0.0
    %735 = vmatpush1.msra.mxu0 0.0
    %736 = vmatprep.subr.mxu0 0.0
    %737 = vmatpush1.msra.mxu0 0.0
    %738 = vmatprep.subr.mxu0 0.0
    %739 = vmatpush1.msra.mxu0 0.0
    %740 = vmatprep.subr.mxu0 0.0
    %741 = vmatpush1.msra.mxu0 0.0
    %742 = vmatprep.subr.mxu0 0.0
    %743 = vmatpush1.msra.mxu0 0.0
    %744 = vmatprep.subr.mxu0 0.0
    %745 = vmatpush1.msra.mxu0 0.0
    %746 = vmatprep.subr.mxu0 0.0
    %747 = vmatpush1.msra.mxu0 0.0
    %748 = vmatprep.subr.mxu0 0.0
    %749 = vmatpush1.msra.mxu0 0.0
    %750 = vmatprep.subr.mxu0 0.0
    %751 = vmatpush1.msra.mxu0 0.0
    %752 = vmatprep.subr.mxu0 0.0
    %753 = vmatpush1.msra.mxu0 0.0
    %754 = vmatprep.subr.mxu0 0.0
    %755 = vmatpush1.msra.mxu0 0.0
    %756 = vmatprep.subr.mxu0 0.0
    %757 = vmatpush1.msra.mxu0 0.0
    %758 = vmatprep.subr.mxu0 0.0
    %759 = vmatpush1.msra.mxu0 0.0
    %760 = vmatprep.subr.mxu0 0.0
    %761 = vmatpush1.msra.mxu0 0.0
    %762 = vmatprep.subr.mxu0 0.0
    %763 = vmatpush1.msra.mxu0 0.0
    %764 = vmatprep.subr.mxu0 0.0
    %765 = vmatpush1.msra.mxu0 0.0
    %766 = vmatprep.subr.mxu0 0.0
    %767 = vmatpush1.msra.mxu0 0.0
    %768 = vmatprep.subr.mxu0 0.0
    %769 = vmatpush1.msra.mxu0 0.0
    %770 = vmatprep.subr.mxu0 0.0
    %771 = vmatpush1.msra.mxu0 0.0
    %772 = vmatprep.subr.mxu0 0.0
    %773 = vmatpush1.msra.mxu0 0.0
    %774 = vmatprep.subr.mxu0 0.0
    %775 = vmatpush1.msra.mxu0 0.0
    %776 = vmatprep.subr.mxu0 0.0
    %777 = vmatpush1.msra.mxu0 0.0
    %778 = vmatprep.subr.mxu0 0.0
    %779 = vmatpush1.msra.mxu0 0.0
    %780 = vmatprep.mubr.f32.mxu0 0.0
    %v781 = vand.u32 %v602, 4294901760
    %782 = vmatmul.mubr.f32.gmra.mrb[0].mxu0 %v781
    %v783 = vpop.f32.mrb[0].mxu0
    %v784 = vadd.f32 %v683, %v783
    %v785 = vpop.f32.mrb[0].mxu0
    %786 = vmatprep.mubr.f32.mxu0 0.0
    %v787 = vand.u32 %v605, 4294901760
    %788 = vmatmul.mubr.f32.gmra.mrb[0].mxu0 %v787
    %v789 = vpop.f32.mrb[0].mxu0
    %v790 = vadd.f32 %v693, %v789
    %v791 = vpop.f32.mrb[0].mxu0
    %792 = vdwg.mxu0
    %793 = vmatprep.subr.mxu0 0.0
    %v794 = vand.u32 %v589, 4294901760
    %v795 = vsub.f32 %v589, %v794
    %796 = vmatpush1.msra.mxu0 %v795
    %797 = vmatprep.subr.mxu0 0.0
    %v798 = vand.u32 %v590, 4294901760
    %v799 = vsub.f32 %v590, %v798
    %800 = vmatpush1.msra.mxu0 %v799
    %801 = vmatprep.subr.mxu0 0.0
    %v802 = vand.u32 %v591, 4294901760
    %v803 = vsub.f32 %v591, %v802
    %804 = vmatpush1.msra.mxu0 %v803
    %805 = vmatprep.subr.mxu0 0.0
    %v806 = vand.u32 %v592, 4294901760
    %v807 = vsub.f32 %v592, %v806
    %808 = vmatpush1.msra.mxu0 %v807
    %809 = vmatprep.subr.mxu0 0.0
    %810 = vmatpush1.msra.mxu0 0.0
    %811 = vmatprep.subr.mxu0 0.0
    %812 = vmatpush1.msra.mxu0 0.0
    %813 = vmatprep.subr.mxu0 0.0
    %814 = vmatpush1.msra.mxu0 0.0
    %815 = vmatprep.subr.mxu0 0.0
    %816 = vmatpush1.msra.mxu0 0.0
    %817 = vmatprep.subr.mxu0 0.0
    %818 = vmatpush1.msra.mxu0 0.0
    %819 = vmatprep.subr.mxu0 0.0
    %820 = vmatpush1.msra.mxu0 0.0
    %821 = vmatprep.subr.mxu0 0.0
    %822 = vmatpush1.msra.mxu0 0.0
    %823 = vmatprep.subr.mxu0 0.0
    %824 = vmatpush1.msra.mxu0 0.0
    %825 = vmatprep.subr.mxu0 0.0
    %826 = vmatpush1.msra.mxu0 0.0
    %827 = vmatprep.subr.mxu0 0.0
    %828 = vmatpush1.msra.mxu0 0.0
    %829 = vmatprep.subr.mxu0 0.0
    %830 = vmatpush1.msra.mxu0 0.0
    %831 = vmatprep.subr.mxu0 0.0
    %832 = vmatpush1.msra.mxu0 0.0
    %833 = vmatprep.subr.mxu0 0.0
    %834 = vmatpush1.msra.mxu0 0.0
    %835 = vmatprep.subr.mxu0 0.0
    %836 = vmatpush1.msra.mxu0 0.0
    %837 = vmatprep.subr.mxu0 0.0
    %838 = vmatpush1.msra.mxu0 0.0
    %839 = vmatprep.subr.mxu0 0.0
    %840 = vmatpush1.msra.mxu0 0.0
    %841 = vmatprep.subr.mxu0 0.0
    %842 = vmatpush1.msra.mxu0 0.0
    %843 = vmatprep.subr.mxu0 0.0
    %844 = vmatpush1.msra.mxu0 0.0
    %845 = vmatprep.subr.mxu0 0.0
    %846 = vmatpush1.msra.mxu0 0.0
    %847 = vmatprep.subr.mxu0 0.0
    %848 = vmatpush1.msra.mxu0 0.0
    %849 = vmatprep.subr.mxu0 0.0
    %850 = vmatpush1.msra.mxu0 0.0
    %851 = vmatprep.subr.mxu0 0.0
    %852 = vmatpush1.msra.mxu0 0.0
    %853 = vmatprep.subr.mxu0 0.0
    %854 = vmatpush1.msra.mxu0 0.0
    %855 = vmatprep.subr.mxu0 0.0
    %856 = vmatpush1.msra.mxu0 0.0
    %857 = vmatprep.subr.mxu0 0.0
    %858 = vmatpush1.msra.mxu0 0.0
    %859 = vmatprep.subr.mxu0 0.0
    %860 = vmatpush1.msra.mxu0 0.0
    %861 = vmatprep.subr.mxu0 0.0
    %862 = vmatpush1.msra.mxu0 0.0
    %863 = vmatprep.subr.mxu0 0.0
    %864 = vmatpush1.msra.mxu0 0.0
    %865 = vmatprep.mubr.f32.mxu0 0.0
    %v866 = vand.u32 %v602, 4294901760
    %v867 = vsub.f32 %v602, %v866
    %868 = vmatmul.mubr.f32.gmra.mrb[0].mxu0 %v867
    %v869 = vpop.f32.mrb[0].mxu0
    %v870 = vadd.f32 %v784, %v869
    %v871 = vpop.f32.mrb[0].mxu0
    %872 = vmatprep.mubr.f32.mxu0 0.0
    %v873 = vand.u32 %v605, 4294901760
    %v874 = vsub.f32 %v605, %v873
    %875 = vmatmul.mubr.f32.gmra.mrb[0].mxu0 %v874
    %v876 = vpop.f32.mrb[0].mxu0
    %v877 = vadd.f32 %v790, %v876
    %v878 = vpop.f32.mrb[0].mxu0
    %879 = vdwg.mxu0
    %880 = vmatprep.subr.mxu0 0.0
    %v881 = vand.u32 %v589, 4294901760
    %882 = vmatpush1.msra.mxu0 %v881
    %883 = vmatprep.subr.mxu0 0.0
    %v884 = vand.u32 %v590, 4294901760
    %885 = vmatpush1.msra.mxu0 %v884
    %886 = vmatprep.subr.mxu0 0.0
    %v887 = vand.u32 %v591, 4294901760
    %888 = vmatpush1.msra.mxu0 %v887
    %889 = vmatprep.subr.mxu0 0.0
    %v890 = vand.u32 %v592, 4294901760
    %891 = vmatpush1.msra.mxu0 %v890
    %892 = vmatprep.subr.mxu0 0.0
    %893 = vmatpush1.msra.mxu0 0.0
    %894 = vmatprep.subr.mxu0 0.0
    %895 = vmatpush1.msra.mxu0 0.0
    %896 = vmatprep.subr.mxu0 0.0
    %897 = vmatpush1.msra.mxu0 0.0
    %898 = vmatprep.subr.mxu0 0.0
    %899 = vmatpush1.msra.mxu0 0.0
    %900 = vmatprep.subr.mxu0 0.0
    %901 = vmatpush1.msra.mxu0 0.0
    %902 = vmatprep.subr.mxu0 0.0
    %903 = vmatpush1.msra.mxu0 0.0
    %904 = vmatprep.subr.mxu0 0.0
    %905 = vmatpush1.msra.mxu0 0.0
    %906 = vmatprep.subr.mxu0 0.0
    %907 = vmatpush1.msra.mxu0 0.0
    %908 = vmatprep.subr.mxu0 0.0
    %909 = vmatpush1.msra.mxu0 0.0
    %910 = vmatprep.subr.mxu0 0.0
    %911 = vmatpush1.msra.mxu0 0.0
    %912 = vmatprep.subr.mxu0 0.0
    %913 = vmatpush1.msra.mxu0 0.0
    %914 = vmatprep.subr.mxu0 0.0
    %915 = vmatpush1.msra.mxu0 0.0
    %916 = vmatprep.subr.mxu0 0.0
    %917 = vmatpush1.msra.mxu0 0.0
    %918 = vmatprep.subr.mxu0 0.0
    %919 = vmatpush1.msra.mxu0 0.0
    %920 = vmatprep.subr.mxu0 0.0
    %921 = vmatpush1.msra.mxu0 0.0
    %922 = vmatprep.subr.mxu0 0.0
    %923 = vmatpush1.msra.mxu0 0.0
    %924 = vmatprep.subr.mxu0 0.0
    %925 = vmatpush1.msra.mxu0 0.0
    %926 = vmatprep.subr.mxu0 0.0
    %927 = vmatpush1.msra.mxu0 0.0
    %928 = vmatprep.subr.mxu0 0.0
    %929 = vmatpush1.msra.mxu0 0.0
    %930 = vmatprep.subr.mxu0 0.0
    %931 = vmatpush1.msra.mxu0 0.0
    %932 = vmatprep.subr.mxu0 0.0
    %933 = vmatpush1.msra.mxu0 0.0
    %934 = vmatprep.subr.mxu0 0.0
    %935 = vmatpush1.msra.mxu0 0.0
    %936 = vmatprep.subr.mxu0 0.0
    %937 = vmatpush1.msra.mxu0 0.0
    %938 = vmatprep.subr.mxu0 0.0
    %939 = vmatpush1.msra.mxu0 0.0
    %940 = vmatprep.subr.mxu0 0.0
    %941 = vmatpush1.msra.mxu0 0.0
    %942 = vmatprep.subr.mxu0 0.0
    %943 = vmatpush1.msra.mxu0 0.0
    %944 = vmatprep.subr.mxu0 0.0
    %945 = vmatpush1.msra.mxu0 0.0
    %946 = vmatprep.subr.mxu0 0.0
    %947 = vmatpush1.msra.mxu0 0.0
    %948 = vmatprep.mubr.f32.mxu0 0.0
    %v949 = vand.u32 %v602, 4294901760
    %v950 = vsub.f32 %v602, %v949
    %v951 = vand.u32 %v950, 4294901760
    %952 = vmatmul.mubr.f32.gmra.mrb[0].mxu0 %v951
    %v953 = vpop.f32.mrb[0].mxu0
    %v954 = vadd.f32 %v870, %v953
    %v955 = vpop.f32.mrb[0].mxu0
    %956 = vmatprep.mubr.f32.mxu0 0.0
    %v957 = vand.u32 %v605, 4294901760
    %v958 = vsub.f32 %v605, %v957
    %v959 = vand.u32 %v958, 4294901760
    %960 = vmatmul.mubr.f32.gmra.mrb[0].mxu0 %v959
    %v961 = vpop.f32.mrb[0].mxu0
    %v962 = vadd.f32 %v877, %v961
    %v963 = vpop.f32.mrb[0].mxu0
    %964 = vdwg.mxu0
    %965 = vmatprep.subr.mxu0 0.0
    %v966 = vand.u32 %v589, 4294901760
    %v967 = vsub.f32 %v589, %v966
    %v968 = vand.u32 %v967, 4294901760
    %969 = vmatpush1.msra.mxu0 %v968
    %970 = vmatprep.subr.mxu0 0.0
    %v971 = vand.u32 %v590, 4294901760
    %v972 = vsub.f32 %v590, %v971
    %v973 = vand.u32 %v972, 4294901760
    %974 = vmatpush1.msra.mxu0 %v973
    %975 = vmatprep.subr.mxu0 0.0
    %v976 = vand.u32 %v591, 4294901760
    %v977 = vsub.f32 %v591, %v976
    %v978 = vand.u32 %v977, 4294901760
    %979 = vmatpush1.msra.mxu0 %v978
    %980 = vmatprep.subr.mxu0 0.0
    %v981 = vand.u32 %v592, 4294901760
    %v982 = vsub.f32 %v592, %v981
    %v983 = vand.u32 %v982, 4294901760
    %984 = vmatpush1.msra.mxu0 %v983
    %985 = vmatprep.subr.mxu0 0.0
    %986 = vmatpush1.msra.mxu0 0.0
    %987 = vmatprep.subr.mxu0 0.0
    %988 = vmatpush1.msra.mxu0 0.0
    %989 = vmatprep.subr.mxu0 0.0
    %990 = vmatpush1.msra.mxu0 0.0
    %991 = vmatprep.subr.mxu0 0.0
    %992 = vmatpush1.msra.mxu0 0.0
    %993 = vmatprep.subr.mxu0 0.0
    %994 = vmatpush1.msra.mxu0 0.0
    %995 = vmatprep.subr.mxu0 0.0
    %996 = vmatpush1.msra.mxu0 0.0
    %997 = vmatprep.subr.mxu0 0.0
    %998 = vmatpush1.msra.mxu0 0.0
    %999 = vmatprep.subr.mxu0 0.0
    %1000 = vmatpush1.msra.mxu0 0.0
    %1001 = vmatprep.subr.mxu0 0.0
    %1002 = vmatpush1.msra.mxu0 0.0
    %1003 = vmatprep.subr.mxu0 0.0
    %1004 = vmatpush1.msra.mxu0 0.0
    %1005 = vmatprep.subr.mxu0 0.0
    %1006 = vmatpush1.msra.mxu0 0.0
    %1007 = vmatprep.subr.mxu0 0.0
    %1008 = vmatpush1.msra.mxu0 0.0
    %1009 = vmatprep.subr.mxu0 0.0
    %1010 = vmatpush1.msra.mxu0 0.0
    %1011 = vmatprep.subr.mxu0 0.0
    %1012 = vmatpush1.msra.mxu0 0.0
    %1013 = vmatprep.subr.mxu0 0.0
    %1014 = vmatpush1.msra.mxu0 0.0
    %1015 = vmatprep.subr.mxu0 0.0
    %1016 = vmatpush1.msra.mxu0 0.0
    %1017 = vmatprep.subr.mxu0 0.0
    %1018 = vmatpush1.msra.mxu0 0.0
    %1019 = vmatprep.subr.mxu0 0.0
    %1020 = vmatpush1.msra.mxu0 0.0
    %1021 = vmatprep.subr.mxu0 0.0
    %1022 = vmatpush1.msra.mxu0 0.0
    %1023 = vmatprep.subr.mxu0 0.0
    %1024 = vmatpush1.msra.mxu0 0.0
    %1025 = vmatprep.subr.mxu0 0.0
    %1026 = vmatpush1.msra.mxu0 0.0
    %1027 = vmatprep.subr.mxu0 0.0
    %1028 = vmatpush1.msra.mxu0 0.0
    %1029 = vmatprep.subr.mxu0 0.0
    %1030 = vmatpush1.msra.mxu0 0.0
    %1031 = vmatprep.subr.mxu0 0.0
    %1032 = vmatpush1.msra.mxu0 0.0
    %1033 = vmatprep.subr.mxu0 0.0
    %1034 = vmatpush1.msra.mxu0 0.0
    %1035 = vmatprep.subr.mxu0 0.0
    %1036 = vmatpush1.msra.mxu0 0.0
    %1037 = vmatprep.subr.mxu0 0.0
    %1038 = vmatpush1.msra.mxu0 0.0
    %1039 = vmatprep.subr.mxu0 0.0
    %1040 = vmatpush1.msra.mxu0 0.0
    %1041 = vmatprep.mubr.f32.mxu0 0.0
    %v1042 = vand.u32 %v602, 4294901760
    %1043 = vmatmul.mubr.f32.gmra.mrb[0].mxu0 %v1042
    %v1044 = vpop.f32.mrb[0].mxu0
    %v1045 = vadd.f32 %v954, %v1044
    %v1046 = vpop.f32.mrb[0].mxu0
    %1047 = vmatprep.mubr.f32.mxu0 0.0
    %v1048 = vand.u32 %v605, 4294901760
    %1049 = vmatmul.mubr.f32.gmra.mrb[0].mxu0 %v1048
    %v1050 = vpop.f32.mrb[0].mxu0
    %v1051 = vadd.f32 %v962, %v1050
    %v1052 = vpop.f32.mrb[0].mxu0
    %1053 = vdwg.mxu0
    %1054 = vmatprep.subr.mxu0 0.0
    %v1055 = vand.u32 %v589, 4294901760
    %1056 = vmatpush1.msra.mxu0 %v1055
    %1057 = vmatprep.subr.mxu0 0.0
    %v1058 = vand.u32 %v590, 4294901760
    %1059 = vmatpush1.msra.mxu0 %v1058
    %1060 = vmatprep.subr.mxu0 0.0
    %v1061 = vand.u32 %v591, 4294901760
    %1062 = vmatpush1.msra.mxu0 %v1061
    %1063 = vmatprep.subr.mxu0 0.0
    %v1064 = vand.u32 %v592, 4294901760
    %1065 = vmatpush1.msra.mxu0 %v1064
    %1066 = vmatprep.subr.mxu0 0.0
    %1067 = vmatpush1.msra.mxu0 0.0
    %1068 = vmatprep.subr.mxu0 0.0
    %1069 = vmatpush1.msra.mxu0 0.0
    %1070 = vmatprep.subr.mxu0 0.0
    %1071 = vmatpush1.msra.mxu0 0.0
    %1072 = vmatprep.subr.mxu0 0.0
    %1073 = vmatpush1.msra.mxu0 0.0
    %1074 = vmatprep.subr.mxu0 0.0
    %1075 = vmatpush1.msra.mxu0 0.0
    %1076 = vmatprep.subr.mxu0 0.0
    %1077 = vmatpush1.msra.mxu0 0.0
    %1078 = vmatprep.subr.mxu0 0.0
    %1079 = vmatpush1.msra.mxu0 0.0
    %1080 = vmatprep.subr.mxu0 0.0
    %1081 = vmatpush1.msra.mxu0 0.0
    %1082 = vmatprep.subr.mxu0 0.0
    %1083 = vmatpush1.msra.mxu0 0.0
    %1084 = vmatprep.subr.mxu0 0.0
    %1085 = vmatpush1.msra.mxu0 0.0
    %1086 = vmatprep.subr.mxu0 0.0
    %1087 = vmatpush1.msra.mxu0 0.0
    %1088 = vmatprep.subr.mxu0 0.0
    %1089 = vmatpush1.msra.mxu0 0.0
    %1090 = vmatprep.subr.mxu0 0.0
    %1091 = vmatpush1.msra.mxu0 0.0
    %1092 = vmatprep.subr.mxu0 0.0
    %1093 = vmatpush1.msra.mxu0 0.0
    %1094 = vmatprep.subr.mxu0 0.0
    %1095 = vmatpush1.msra.mxu0 0.0
    %1096 = vmatprep.subr.mxu0 0.0
    %1097 = vmatpush1.msra.mxu0 0.0
    %1098 = vmatprep.subr.mxu0 0.0
    %1099 = vmatpush1.msra.mxu0 0.0
    %1100 = vmatprep.subr.mxu0 0.0
    %1101 = vmatpush1.msra.mxu0 0.0
    %1102 = vmatprep.subr.mxu0 0.0
    %1103 = vmatpush1.msra.mxu0 0.0
    %1104 = vmatprep.subr.mxu0 0.0
    %1105 = vmatpush1.msra.mxu0 0.0
    %1106 = vmatprep.subr.mxu0 0.0
    %1107 = vmatpush1.msra.mxu0 0.0
    %1108 = vmatprep.subr.mxu0 0.0
    %1109 = vmatpush1.msra.mxu0 0.0
    %1110 = vmatprep.subr.mxu0 0.0
    %1111 = vmatpush1.msra.mxu0 0.0
    %1112 = vmatprep.subr.mxu0 0.0
    %1113 = vmatpush1.msra.mxu0 0.0
    %1114 = vmatprep.subr.mxu0 0.0
    %1115 = vmatpush1.msra.mxu0 0.0
    %1116 = vmatprep.subr.mxu0 0.0
    %1117 = vmatpush1.msra.mxu0 0.0
    %1118 = vmatprep.subr.mxu0 0.0
    %1119 = vmatpush1.msra.mxu0 0.0
    %1120 = vmatprep.subr.mxu0 0.0
    %1121 = vmatpush1.msra.mxu0 0.0
    %1122 = vmatprep.mubr.f32.mxu0 0.0
    %v1123 = vand.u32 %v602, 4294901760
    %1124 = vmatmul.mubr.f32.gmra.mrb[0].mxu0 %v1123
    %v1125 = vpop.f32.mrb[0].mxu0
    %v1126 = vadd.f32 %v1045, %v1125
    %v1127 = vpop.f32.mrb[0].mxu0
    %1128 = vmatprep.mubr.f32.mxu0 0.0
    %v1129 = vand.u32 %v605, 4294901760
    %1130 = vmatmul.mubr.f32.gmra.mrb[0].mxu0 %v1129
    %v1131 = vpop.f32.mrb[0].mxu0
    %v1132 = vadd.f32 %v1051, %v1131
    %v1133 = vpop.f32.mrb[0].mxu0
    %1134 = vdwg.mxu0
    %v1135 = vmax.f32 %v1126, 0.0
    %v1136 = vmax.f32 %v1132, 0.0
    %v1137 = vld [vmem:[#allocation6] sm:$0xff]
    %v1138 = vld [vmem:[#allocation6 + $0x8] sm:$0xff]
    %v1139 = vld [vmem:[#allocation6 + $0x10] sm:$0xff]
    %v1140 = vld [vmem:[#allocation6 + $0x18] sm:$0xff]
    %v1141 = vld [vmem:[#allocation6 + $0x20] sm:$0xff]
    %v1142 = vld [vmem:[#allocation6 + $0x28] sm:$0xff]
    %v1143 = vld [vmem:[#allocation6 + $0x30] sm:$0xff]
    %v1144 = vld [vmem:[#allocation6 + $0x38] sm:$0xff]
    %v1145 = vld [vmem:[%s6] sm:$0x1]
    %v1147 = vlaneseq
    %v1148 = vshrl.u32 %v1147, 7
    %v1149 = vsub.s32 0, %v1148
    %v1150 = vrot.slane %v1145, %v1149
    %vm1152 = vcmask 523264
    %v1154 = vsel %vm1152, %v1135, 0
    %v1157 = vsel %vm1152, %v1136, 0
    %1159 = vmatprep.subr.mxu0 0.0
    %v1160 = vand.u32 %v1137, 4294901760
    %1161 = vmatpush1.msra.mxu0 %v1160
    %1162 = vmatprep.subr.mxu0 0.0
    %v1163 = vand.u32 %v1138, 4294901760
    %1164 = vmatpush1.msra.mxu0 %v1163
    %1165 = vmatprep.subr.mxu0 0.0
    %v1166 = vand.u32 %v1139, 4294901760
    %1167 = vmatpush1.msra.mxu0 %v1166
    %1168 = vmatprep.subr.mxu0 0.0
    %v1169 = vand.u32 %v1140, 4294901760
    %1170 = vmatpush1.msra.mxu0 %v1169
    %1171 = vmatprep.subr.mxu0 0.0
    %v1172 = vand.u32 %v1141, 4294901760
    %1173 = vmatpush1.msra.mxu0 %v1172
    %1174 = vmatprep.subr.mxu0 0.0
    %v1175 = vand.u32 %v1142, 4294901760
    %1176 = vmatpush1.msra.mxu0 %v1175
    %1177 = vmatprep.subr.mxu0 0.0
    %v1178 = vand.u32 %v1143, 4294901760
    %1179 = vmatpush1.msra.mxu0 %v1178
    %1180 = vmatprep.subr.mxu0 0.0
    %v1181 = vand.u32 %v1144, 4294901760
    %1182 = vmatpush1.msra.mxu0 %v1181
    %1183 = vmatprep.subr.mxu0 0.0
    %1184 = vmatpush1.msra.mxu0 0.0
    %1185 = vmatprep.subr.mxu0 0.0
    %1186 = vmatpush1.msra.mxu0 0.0
    %1187 = vmatprep.subr.mxu0 0.0
    %1188 = vmatpush1.msra.mxu0 0.0
    %1189 = vmatprep.subr.mxu0 0.0
    %1190 = vmatpush1.msra.mxu0 0.0
    %1191 = vmatprep.subr.mxu0 0.0
    %1192 = vmatpush1.msra.mxu0 0.0
    %1193 = vmatprep.subr.mxu0 0.0
    %1194 = vmatpush1.msra.mxu0 0.0
    %1195 = vmatprep.subr.mxu0 0.0
    %1196 = vmatpush1.msra.mxu0 0.0
    %1197 = vmatprep.subr.mxu0 0.0
    %1198 = vmatpush1.msra.mxu0 0.0
    %1199 = vmatprep.subr.mxu0 0.0
    %1200 = vmatpush1.msra.mxu0 0.0
    %1201 = vmatprep.subr.mxu0 0.0
    %1202 = vmatpush1.msra.mxu0 0.0
    %1203 = vmatprep.subr.mxu0 0.0
    %1204 = vmatpush1.msra.mxu0 0.0
    %1205 = vmatprep.subr.mxu0 0.0
    %1206 = vmatpush1.msra.mxu0 0.0
    %1207 = vmatprep.subr.mxu0 0.0
    %1208 = vmatpush1.msra.mxu0 0.0
    %1209 = vmatprep.subr.mxu0 0.0
    %1210 = vmatpush1.msra.mxu0 0.0
    %1211 = vmatprep.subr.mxu0 0.0
    %1212 = vmatpush1.msra.mxu0 0.0
    %1213 = vmatprep.subr.mxu0 0.0
    %1214 = vmatpush1.msra.mxu0 0.0
    %1215 = vmatprep.subr.mxu0 0.0
    %1216 = vmatpush1.msra.mxu0 0.0
    %1217 = vmatprep.subr.mxu0 0.0
    %1218 = vmatpush1.msra.mxu0 0.0
    %1219 = vmatprep.subr.mxu0 0.0
    %1220 = vmatpush1.msra.mxu0 0.0
    %1221 = vmatprep.subr.mxu0 0.0
    %1222 = vmatpush1.msra.mxu0 0.0
    %1223 = vmatprep.subr.mxu0 0.0
    %1224 = vmatpush1.msra.mxu0 0.0
    %1225 = vmatprep.subr.mxu0 0.0
    %1226 = vmatpush1.msra.mxu0 0.0
    %1227 = vmatprep.subr.mxu0 0.0
    %1228 = vmatpush1.msra.mxu0 0.0
    %1229 = vmatprep.subr.mxu0 0.0
    %1230 = vmatpush1.msra.mxu0 0.0
    %1231 = vmatprep.mubr.f32.mxu0 0.0
    %v1232 = vand.u32 %v1154, 4294901760
    %v1233 = vsub.f32 %v1154, %v1232
    %v1234 = vand.u32 %v1233, 4294901760
    %v1235 = vsub.f32 %v1233, %v1234
    %v1236 = vand.u32 %v1235, 4294901760
    %1237 = vmatmul.mubr.f32.gmra.mrb[0].mxu0 %v1236
    %v1238 = vpop.f32.mrb[0].mxu0
    %v1239 = vadd.f32 %v1150, %v1238
    %v1240 = vpop.f32.mrb[0].mxu0
    %1241 = vmatprep.mubr.f32.mxu0 0.0
    %v1242 = vand.u32 %v1157, 4294901760
    %v1243 = vsub.f32 %v1157, %v1242
    %v1244 = vand.u32 %v1243, 4294901760
    %v1245 = vsub.f32 %v1243, %v1244
    %v1246 = vand.u32 %v1245, 4294901760
    %1247 = vmatmul.mubr.f32.gmra.mrb[0].mxu0 %v1246
    %v1248 = vpop.f32.mrb[0].mxu0
    %v1249 = vadd.f32 %v1150, %v1248
    %v1250 = vpop.f32.mrb[0].mxu0
    %1251 = vdwg.mxu0
    %1252 = vmatprep.subr.mxu0 0.0
    %v1253 = vand.u32 %v1137, 4294901760
    %v1254 = vsub.f32 %v1137, %v1253
    %v1255 = vand.u32 %v1254, 4294901760
    %v1256 = vsub.f32 %v1254, %v1255
    %v1257 = vand.u32 %v1256, 4294901760
    %1258 = vmatpush1.msra.mxu0 %v1257
    %1259 = vmatprep.subr.mxu0 0.0
    %v1260 = vand.u32 %v1138, 4294901760
    %v1261 = vsub.f32 %v1138, %v1260
    %v1262 = vand.u32 %v1261, 4294901760
    %v1263 = vsub.f32 %v1261, %v1262
    %v1264 = vand.u32 %v1263, 4294901760
    %1265 = vmatpush1.msra.mxu0 %v1264
    %1266 = vmatprep.subr.mxu0 0.0
    %v1267 = vand.u32 %v1139, 4294901760
    %v1268 = vsub.f32 %v1139, %v1267
    %v1269 = vand.u32 %v1268, 4294901760
    %v1270 = vsub.f32 %v1268, %v1269
    %v1271 = vand.u32 %v1270, 4294901760
    %1272 = vmatpush1.msra.mxu0 %v1271
    %1273 = vmatprep.subr.mxu0 0.0
    %v1274 = vand.u32 %v1140, 4294901760
    %v1275 = vsub.f32 %v1140, %v1274
    %v1276 = vand.u32 %v1275, 4294901760
    %v1277 = vsub.f32 %v1275, %v1276
    %v1278 = vand.u32 %v1277, 4294901760
    %1279 = vmatpush1.msra.mxu0 %v1278
    %1280 = vmatprep.subr.mxu0 0.0
    %v1281 = vand.u32 %v1141, 4294901760
    %v1282 = vsub.f32 %v1141, %v1281
    %v1283 = vand.u32 %v1282, 4294901760
    %v1284 = vsub.f32 %v1282, %v1283
    %v1285 = vand.u32 %v1284, 4294901760
    %1286 = vmatpush1.msra.mxu0 %v1285
    %1287 = vmatprep.subr.mxu0 0.0
    %v1288 = vand.u32 %v1142, 4294901760
    %v1289 = vsub.f32 %v1142, %v1288
    %v1290 = vand.u32 %v1289, 4294901760
    %v1291 = vsub.f32 %v1289, %v1290
    %v1292 = vand.u32 %v1291, 4294901760
    %1293 = vmatpush1.msra.mxu0 %v1292
    %1294 = vmatprep.subr.mxu0 0.0
    %v1295 = vand.u32 %v1143, 4294901760
    %v1296 = vsub.f32 %v1143, %v1295
    %v1297 = vand.u32 %v1296, 4294901760
    %v1298 = vsub.f32 %v1296, %v1297
    %v1299 = vand.u32 %v1298, 4294901760
    %1300 = vmatpush1.msra.mxu0 %v1299
    %1301 = vmatprep.subr.mxu0 0.0
    %v1302 = vand.u32 %v1144, 4294901760
    %v1303 = vsub.f32 %v1144, %v1302
    %v1304 = vand.u32 %v1303, 4294901760
    %v1305 = vsub.f32 %v1303, %v1304
    %v1306 = vand.u32 %v1305, 4294901760
    %1307 = vmatpush1.msra.mxu0 %v1306
    %1308 = vmatprep.subr.mxu0 0.0
    %1309 = vmatpush1.msra.mxu0 0.0
    %1310 = vmatprep.subr.mxu0 0.0
    %1311 = vmatpush1.msra.mxu0 0.0
    %1312 = vmatprep.subr.mxu0 0.0
    %1313 = vmatpush1.msra.mxu0 0.0
    %1314 = vmatprep.subr.mxu0 0.0
    %1315 = vmatpush1.msra.mxu0 0.0
    %1316 = vmatprep.subr.mxu0 0.0
    %1317 = vmatpush1.msra.mxu0 0.0
    %1318 = vmatprep.subr.mxu0 0.0
    %1319 = vmatpush1.msra.mxu0 0.0
    %1320 = vmatprep.subr.mxu0 0.0
    %1321 = vmatpush1.msra.mxu0 0.0
    %1322 = vmatprep.subr.mxu0 0.0
    %1323 = vmatpush1.msra.mxu0 0.0
    %1324 = vmatprep.subr.mxu0 0.0
    %1325 = vmatpush1.msra.mxu0 0.0
    %1326 = vmatprep.subr.mxu0 0.0
    %1327 = vmatpush1.msra.mxu0 0.0
    %1328 = vmatprep.subr.mxu0 0.0
    %1329 = vmatpush1.msra.mxu0 0.0
    %1330 = vmatprep.subr.mxu0 0.0
    %1331 = vmatpush1.msra.mxu0 0.0
    %1332 = vmatprep.subr.mxu0 0.0
    %1333 = vmatpush1.msra.mxu0 0.0
    %1334 = vmatprep.subr.mxu0 0.0
    %1335 = vmatpush1.msra.mxu0 0.0
    %1336 = vmatprep.subr.mxu0 0.0
    %1337 = vmatpush1.msra.mxu0 0.0
    %1338 = vmatprep.subr.mxu0 0.0
    %1339 = vmatpush1.msra.mxu0 0.0
    %1340 = vmatprep.subr.mxu0 0.0
    %1341 = vmatpush1.msra.mxu0 0.0
    %1342 = vmatprep.subr.mxu0 0.0
    %1343 = vmatpush1.msra.mxu0 0.0
    %1344 = vmatprep.subr.mxu0 0.0
    %1345 = vmatpush1.msra.mxu0 0.0
    %1346 = vmatprep.subr.mxu0 0.0
    %1347 = vmatpush1.msra.mxu0 0.0
    %1348 = vmatprep.subr.mxu0 0.0
    %1349 = vmatpush1.msra.mxu0 0.0
    %1350 = vmatprep.subr.mxu0 0.0
    %1351 = vmatpush1.msra.mxu0 0.0
    %1352 = vmatprep.subr.mxu0 0.0
    %1353 = vmatpush1.msra.mxu0 0.0
    %1354 = vmatprep.subr.mxu0 0.0
    %1355 = vmatpush1.msra.mxu0 0.0
    %1356 = vmatprep.mubr.f32.mxu0 0.0
    %v1357 = vand.u32 %v1154, 4294901760
    %1358 = vmatmul.mubr.f32.gmra.mrb[0].mxu0 %v1357
    %v1359 = vpop.f32.mrb[0].mxu0
    %v1360 = vadd.f32 %v1239, %v1359
    %v1361 = vpop.f32.mrb[0].mxu0
    %1362 = vmatprep.mubr.f32.mxu0 0.0
    %v1363 = vand.u32 %v1157, 4294901760
    %1364 = vmatmul.mubr.f32.gmra.mrb[0].mxu0 %v1363
    %v1365 = vpop.f32.mrb[0].mxu0
    %v1366 = vadd.f32 %v1249, %v1365
    %v1367 = vpop.f32.mrb[0].mxu0
    %1368 = vdwg.mxu0
    %1369 = vmatprep.subr.mxu0 0.0
    %v1370 = vand.u32 %v1137, 4294901760
    %v1371 = vsub.f32 %v1137, %v1370
    %1372 = vmatpush1.msra.mxu0 %v1371
    %1373 = vmatprep.subr.mxu0 0.0
    %v1374 = vand.u32 %v1138, 4294901760
    %v1375 = vsub.f32 %v1138, %v1374
    %1376 = vmatpush1.msra.mxu0 %v1375
    %1377 = vmatprep.subr.mxu0 0.0
    %v1378 = vand.u32 %v1139, 4294901760
    %v1379 = vsub.f32 %v1139, %v1378
    %1380 = vmatpush1.msra.mxu0 %v1379
    %1381 = vmatprep.subr.mxu0 0.0
    %v1382 = vand.u32 %v1140, 4294901760
    %v1383 = vsub.f32 %v1140, %v1382
    %1384 = vmatpush1.msra.mxu0 %v1383
    %1385 = vmatprep.subr.mxu0 0.0
    %v1386 = vand.u32 %v1141, 4294901760
    %v1387 = vsub.f32 %v1141, %v1386
    %1388 = vmatpush1.msra.mxu0 %v1387
    %1389 = vmatprep.subr.mxu0 0.0
    %v1390 = vand.u32 %v1142, 4294901760
    %v1391 = vsub.f32 %v1142, %v1390
    %1392 = vmatpush1.msra.mxu0 %v1391
    %1393 = vmatprep.subr.mxu0 0.0
    %v1394 = vand.u32 %v1143, 4294901760
    %v1395 = vsub.f32 %v1143, %v1394
    %1396 = vmatpush1.msra.mxu0 %v1395
    %1397 = vmatprep.subr.mxu0 0.0
    %v1398 = vand.u32 %v1144, 4294901760
    %v1399 = vsub.f32 %v1144, %v1398
    %1400 = vmatpush1.msra.mxu0 %v1399
    %1401 = vmatprep.subr.mxu0 0.0
    %1402 = vmatpush1.msra.mxu0 0.0
    %1403 = vmatprep.subr.mxu0 0.0
    %1404 = vmatpush1.msra.mxu0 0.0
    %1405 = vmatprep.subr.mxu0 0.0
    %1406 = vmatpush1.msra.mxu0 0.0
    %1407 = vmatprep.subr.mxu0 0.0
    %1408 = vmatpush1.msra.mxu0 0.0
    %1409 = vmatprep.subr.mxu0 0.0
    %1410 = vmatpush1.msra.mxu0 0.0
    %1411 = vmatprep.subr.mxu0 0.0
    %1412 = vmatpush1.msra.mxu0 0.0
    %1413 = vmatprep.subr.mxu0 0.0
    %1414 = vmatpush1.msra.mxu0 0.0
    %1415 = vmatprep.subr.mxu0 0.0
    %1416 = vmatpush1.msra.mxu0 0.0
    %1417 = vmatprep.subr.mxu0 0.0
    %1418 = vmatpush1.msra.mxu0 0.0
    %1419 = vmatprep.subr.mxu0 0.0
    %1420 = vmatpush1.msra.mxu0 0.0
    %1421 = vmatprep.subr.mxu0 0.0
    %1422 = vmatpush1.msra.mxu0 0.0
    %1423 = vmatprep.subr.mxu0 0.0
    %1424 = vmatpush1.msra.mxu0 0.0
    %1425 = vmatprep.subr.mxu0 0.0
    %1426 = vmatpush1.msra.mxu0 0.0
    %1427 = vmatprep.subr.mxu0 0.0
    %1428 = vmatpush1.msra.mxu0 0.0
    %1429 = vmatprep.subr.mxu0 0.0
    %1430 = vmatpush1.msra.mxu0 0.0
    %1431 = vmatprep.subr.mxu0 0.0
    %1432 = vmatpush1.msra.mxu0 0.0
    %1433 = vmatprep.subr.mxu0 0.0
    %1434 = vmatpush1.msra.mxu0 0.0
    %1435 = vmatprep.subr.mxu0 0.0
    %1436 = vmatpush1.msra.mxu0 0.0
    %1437 = vmatprep.subr.mxu0 0.0
    %1438 = vmatpush1.msra.mxu0 0.0
    %1439 = vmatprep.subr.mxu0 0.0
    %1440 = vmatpush1.msra.mxu0 0.0
    %1441 = vmatprep.subr.mxu0 0.0
    %1442 = vmatpush1.msra.mxu0 0.0
    %1443 = vmatprep.subr.mxu0 0.0
    %1444 = vmatpush1.msra.mxu0 0.0
    %1445 = vmatprep.subr.mxu0 0.0
    %1446 = vmatpush1.msra.mxu0 0.0
    %1447 = vmatprep.subr.mxu0 0.0
    %1448 = vmatpush1.msra.mxu0 0.0
    %1449 = vmatprep.mubr.f32.mxu0 0.0
    %v1450 = vand.u32 %v1154, 4294901760
    %v1451 = vsub.f32 %v1154, %v1450
    %1452 = vmatmul.mubr.f32.gmra.mrb[0].mxu0 %v1451
    %v1453 = vpop.f32.mrb[0].mxu0
    %v1454 = vadd.f32 %v1360, %v1453
    %v1455 = vpop.f32.mrb[0].mxu0
    %1456 = vmatprep.mubr.f32.mxu0 0.0
    %v1457 = vand.u32 %v1157, 4294901760
    %v1458 = vsub.f32 %v1157, %v1457
    %1459 = vmatmul.mubr.f32.gmra.mrb[0].mxu0 %v1458
    %v1460 = vpop.f32.mrb[0].mxu0
    %v1461 = vadd.f32 %v1366, %v1460
    %v1462 = vpop.f32.mrb[0].mxu0
    %1463 = vdwg.mxu0
    %1464 = vmatprep.subr.mxu0 0.0
    %v1465 = vand.u32 %v1137, 4294901760
    %1466 = vmatpush1.msra.mxu0 %v1465
    %1467 = vmatprep.subr.mxu0 0.0
    %v1468 = vand.u32 %v1138, 4294901760
    %1469 = vmatpush1.msra.mxu0 %v1468
    %1470 = vmatprep.subr.mxu0 0.0
    %v1471 = vand.u32 %v1139, 4294901760
    %1472 = vmatpush1.msra.mxu0 %v1471
    %1473 = vmatprep.subr.mxu0 0.0
    %v1474 = vand.u32 %v1140, 4294901760
    %1475 = vmatpush1.msra.mxu0 %v1474
    %1476 = vmatprep.subr.mxu0 0.0
    %v1477 = vand.u32 %v1141, 4294901760
    %1478 = vmatpush1.msra.mxu0 %v1477
    %1479 = vmatprep.subr.mxu0 0.0
    %v1480 = vand.u32 %v1142, 4294901760
    %1481 = vmatpush1.msra.mxu0 %v1480
    %1482 = vmatprep.subr.mxu0 0.0
    %v1483 = vand.u32 %v1143, 4294901760
    %1484 = vmatpush1.msra.mxu0 %v1483
    %1485 = vmatprep.subr.mxu0 0.0
    %v1486 = vand.u32 %v1144, 4294901760
    %1487 = vmatpush1.msra.mxu0 %v1486
    %1488 = vmatprep.subr.mxu0 0.0
    %1489 = vmatpush1.msra.mxu0 0.0
    %1490 = vmatprep.subr.mxu0 0.0
    %1491 = vmatpush1.msra.mxu0 0.0
    %1492 = vmatprep.subr.mxu0 0.0
    %1493 = vmatpush1.msra.mxu0 0.0
    %1494 = vmatprep.subr.mxu0 0.0
    %1495 = vmatpush1.msra.mxu0 0.0
    %1496 = vmatprep.subr.mxu0 0.0
    %1497 = vmatpush1.msra.mxu0 0.0
    %1498 = vmatprep.subr.mxu0 0.0
    %1499 = vmatpush1.msra.mxu0 0.0
    %1500 = vmatprep.subr.mxu0 0.0
    %1501 = vmatpush1.msra.mxu0 0.0
    %1502 = vmatprep.subr.mxu0 0.0
    %1503 = vmatpush1.msra.mxu0 0.0
    %1504 = vmatprep.subr.mxu0 0.0
    %1505 = vmatpush1.msra.mxu0 0.0
    %1506 = vmatprep.subr.mxu0 0.0
    %1507 = vmatpush1.msra.mxu0 0.0
    %1508 = vmatprep.subr.mxu0 0.0
    %1509 = vmatpush1.msra.mxu0 0.0
    %1510 = vmatprep.subr.mxu0 0.0
    %1511 = vmatpush1.msra.mxu0 0.0
    %1512 = vmatprep.subr.mxu0 0.0
    %1513 = vmatpush1.msra.mxu0 0.0
    %1514 = vmatprep.subr.mxu0 0.0
    %1515 = vmatpush1.msra.mxu0 0.0
    %1516 = vmatprep.subr.mxu0 0.0
    %1517 = vmatpush1.msra.mxu0 0.0
    %1518 = vmatprep.subr.mxu0 0.0
    %1519 = vmatpush1.msra.mxu0 0.0
    %1520 = vmatprep.subr.mxu0 0.0
    %1521 = vmatpush1.msra.mxu0 0.0
    %1522 = vmatprep.subr.mxu0 0.0
    %1523 = vmatpush1.msra.mxu0 0.0
    %1524 = vmatprep.subr.mxu0 0.0
    %1525 = vmatpush1.msra.mxu0 0.0
    %1526 = vmatprep.subr.mxu0 0.0
    %1527 = vmatpush1.msra.mxu0 0.0
    %1528 = vmatprep.subr.mxu0 0.0
    %1529 = vmatpush1.msra.mxu0 0.0
    %1530 = vmatprep.subr.mxu0 0.0
    %1531 = vmatpush1.msra.mxu0 0.0
    %1532 = vmatprep.subr.mxu0 0.0
    %1533 = vmatpush1.msra.mxu0 0.0
    %1534 = vmatprep.subr.mxu0 0.0
    %1535 = vmatpush1.msra.mxu0 0.0
    %1536 = vmatprep.mubr.f32.mxu0 0.0
    %v1537 = vand.u32 %v1154, 4294901760
    %v1538 = vsub.f32 %v1154, %v1537
    %v1539 = vand.u32 %v1538, 4294901760
    %1540 = vmatmul.mubr.f32.gmra.mrb[0].mxu0 %v1539
    %v1541 = vpop.f32.mrb[0].mxu0
    %v1542 = vadd.f32 %v1454, %v1541
    %v1543 = vpop.f32.mrb[0].mxu0
    %1544 = vmatprep.mubr.f32.mxu0 0.0
    %v1545 = vand.u32 %v1157, 4294901760
    %v1546 = vsub.f32 %v1157, %v1545
    %v1547 = vand.u32 %v1546, 4294901760
    %1548 = vmatmul.mubr.f32.gmra.mrb[0].mxu0 %v1547
    %v1549 = vpop.f32.mrb[0].mxu0
    %v1550 = vadd.f32 %v1461, %v1549
    %v1551 = vpop.f32.mrb[0].mxu0
    %1552 = vdwg.mxu0
    %1553 = vmatprep.subr.mxu0 0.0
    %v1554 = vand.u32 %v1137, 4294901760
    %v1555 = vsub.f32 %v1137, %v1554
    %v1556 = vand.u32 %v1555, 4294901760
    %1557 = vmatpush1.msra.mxu0 %v1556
    %1558 = vmatprep.subr.mxu0 0.0
    %v1559 = vand.u32 %v1138, 4294901760
    %v1560 = vsub.f32 %v1138, %v1559
    %v1561 = vand.u32 %v1560, 4294901760
    %1562 = vmatpush1.msra.mxu0 %v1561
    %1563 = vmatprep.subr.mxu0 0.0
    %v1564 = vand.u32 %v1139, 4294901760
    %v1565 = vsub.f32 %v1139, %v1564
    %v1566 = vand.u32 %v1565, 4294901760
    %1567 = vmatpush1.msra.mxu0 %v1566
    %1568 = vmatprep.subr.mxu0 0.0
    %v1569 = vand.u32 %v1140, 4294901760
    %v1570 = vsub.f32 %v1140, %v1569
    %v1571 = vand.u32 %v1570, 4294901760
    %1572 = vmatpush1.msra.mxu0 %v1571
    %1573 = vmatprep.subr.mxu0 0.0
    %v1574 = vand.u32 %v1141, 4294901760
    %v1575 = vsub.f32 %v1141, %v1574
    %v1576 = vand.u32 %v1575, 4294901760
    %1577 = vmatpush1.msra.mxu0 %v1576
    %1578 = vmatprep.subr.mxu0 0.0
    %v1579 = vand.u32 %v1142, 4294901760
    %v1580 = vsub.f32 %v1142, %v1579
    %v1581 = vand.u32 %v1580, 4294901760
    %1582 = vmatpush1.msra.mxu0 %v1581
    %1583 = vmatprep.subr.mxu0 0.0
    %v1584 = vand.u32 %v1143, 4294901760
    %v1585 = vsub.f32 %v1143, %v1584
    %v1586 = vand.u32 %v1585, 4294901760
    %1587 = vmatpush1.msra.mxu0 %v1586
    %1588 = vmatprep.subr.mxu0 0.0
    %v1589 = vand.u32 %v1144, 4294901760
    %v1590 = vsub.f32 %v1144, %v1589
    %v1591 = vand.u32 %v1590, 4294901760
    %1592 = vmatpush1.msra.mxu0 %v1591
    %1593 = vmatprep.subr.mxu0 0.0
    %1594 = vmatpush1.msra.mxu0 0.0
    %1595 = vmatprep.subr.mxu0 0.0
    %1596 = vmatpush1.msra.mxu0 0.0
    %1597 = vmatprep.subr.mxu0 0.0
    %1598 = vmatpush1.msra.mxu0 0.0
    %1599 = vmatprep.subr.mxu0 0.0
    %1600 = vmatpush1.msra.mxu0 0.0
    %1601 = vmatprep.subr.mxu0 0.0
    %1602 = vmatpush1.msra.mxu0 0.0
    %1603 = vmatprep.subr.mxu0 0.0
    %1604 = vmatpush1.msra.mxu0 0.0
    %1605 = vmatprep.subr.mxu0 0.0
    %1606 = vmatpush1.msra.mxu0 0.0
    %1607 = vmatprep.subr.mxu0 0.0
    %1608 = vmatpush1.msra.mxu0 0.0
    %1609 = vmatprep.subr.mxu0 0.0
    %1610 = vmatpush1.msra.mxu0 0.0
    %1611 = vmatprep.subr.mxu0 0.0
    %1612 = vmatpush1.msra.mxu0 0.0
    %1613 = vmatprep.subr.mxu0 0.0
    %1614 = vmatpush1.msra.mxu0 0.0
    %1615 = vmatprep.subr.mxu0 0.0
    %1616 = vmatpush1.msra.mxu0 0.0
    %1617 = vmatprep.subr.mxu0 0.0
    %1618 = vmatpush1.msra.mxu0 0.0
    %1619 = vmatprep.subr.mxu0 0.0
    %1620 = vmatpush1.msra.mxu0 0.0
    %1621 = vmatprep.subr.mxu0 0.0
    %1622 = vmatpush1.msra.mxu0 0.0
    %1623 = vmatprep.subr.mxu0 0.0
    %1624 = vmatpush1.msra.mxu0 0.0
    %1625 = vmatprep.subr.mxu0 0.0
    %1626 = vmatpush1.msra.mxu0 0.0
    %1627 = vmatprep.subr.mxu0 0.0
    %1628 = vmatpush1.msra.mxu0 0.0
    %1629 = vmatprep.subr.mxu0 0.0
    %1630 = vmatpush1.msra.mxu0 0.0
    %1631 = vmatprep.subr.mxu0 0.0
    %1632 = vmatpush1.msra.mxu0 0.0
    %1633 = vmatprep.subr.mxu0 0.0
    %1634 = vmatpush1.msra.mxu0 0.0
    %1635 = vmatprep.subr.mxu0 0.0
    %1636 = vmatpush1.msra.mxu0 0.0
    %1637 = vmatprep.subr.mxu0 0.0
    %1638 = vmatpush1.msra.mxu0 0.0
    %1639 = vmatprep.subr.mxu0 0.0
    %1640 = vmatpush1.msra.mxu0 0.0
    %1641 = vmatprep.mubr.f32.mxu0 0.0
    %v1642 = vand.u32 %v1154, 4294901760
    %1643 = vmatmul.mubr.f32.gmra.mrb[0].mxu0 %v1642
    %v1644 = vpop.f32.mrb[0].mxu0
    %v1645 = vadd.f32 %v1542, %v1644
    %v1646 = vpop.f32.mrb[0].mxu0
    %1647 = vmatprep.mubr.f32.mxu0 0.0
    %v1648 = vand.u32 %v1157, 4294901760
    %1649 = vmatmul.mubr.f32.gmra.mrb[0].mxu0 %v1648
    %v1650 = vpop.f32.mrb[0].mxu0
    %v1651 = vadd.f32 %v1550, %v1650
    %v1652 = vpop.f32.mrb[0].mxu0
    %1653 = vdwg.mxu0
    %1654 = vmatprep.subr.mxu0 0.0
    %v1655 = vand.u32 %v1137, 4294901760
    %1656 = vmatpush1.msra.mxu0 %v1655
    %1657 = vmatprep.subr.mxu0 0.0
    %v1658 = vand.u32 %v1138, 4294901760
    %1659 = vmatpush1.msra.mxu0 %v1658
    %1660 = vmatprep.subr.mxu0 0.0
    %v1661 = vand.u32 %v1139, 4294901760
    %1662 = vmatpush1.msra.mxu0 %v1661
    %1663 = vmatprep.subr.mxu0 0.0
    %v1664 = vand.u32 %v1140, 4294901760
    %1665 = vmatpush1.msra.mxu0 %v1664
    %1666 = vmatprep.subr.mxu0 0.0
    %v1667 = vand.u32 %v1141, 4294901760
    %1668 = vmatpush1.msra.mxu0 %v1667
    %1669 = vmatprep.subr.mxu0 0.0
    %v1670 = vand.u32 %v1142, 4294901760
    %1671 = vmatpush1.msra.mxu0 %v1670
    %1672 = vmatprep.subr.mxu0 0.0
    %v1673 = vand.u32 %v1143, 4294901760
    %1674 = vmatpush1.msra.mxu0 %v1673
    %1675 = vmatprep.subr.mxu0 0.0
    %v1676 = vand.u32 %v1144, 4294901760
    %1677 = vmatpush1.msra.mxu0 %v1676
    %1678 = vmatprep.subr.mxu0 0.0
    %1679 = vmatpush1.msra.mxu0 0.0
    %1680 = vmatprep.subr.mxu0 0.0
    %1681 = vmatpush1.msra.mxu0 0.0
    %1682 = vmatprep.subr.mxu0 0.0
    %1683 = vmatpush1.msra.mxu0 0.0
    %1684 = vmatprep.subr.mxu0 0.0
    %1685 = vmatpush1.msra.mxu0 0.0
    %1686 = vmatprep.subr.mxu0 0.0
    %1687 = vmatpush1.msra.mxu0 0.0
    %1688 = vmatprep.subr.mxu0 0.0
    %1689 = vmatpush1.msra.mxu0 0.0
    %1690 = vmatprep.subr.mxu0 0.0
    %1691 = vmatpush1.msra.mxu0 0.0
    %1692 = vmatprep.subr.mxu0 0.0
    %1693 = vmatpush1.msra.mxu0 0.0
    %1694 = vmatprep.subr.mxu0 0.0
    %1695 = vmatpush1.msra.mxu0 0.0
    %1696 = vmatprep.subr.mxu0 0.0
    %1697 = vmatpush1.msra.mxu0 0.0
    %1698 = vmatprep.subr.mxu0 0.0
    %1699 = vmatpush1.msra.mxu0 0.0
    %1700 = vmatprep.subr.mxu0 0.0
    %1701 = vmatpush1.msra.mxu0 0.0
    %1702 = vmatprep.subr.mxu0 0.0
    %1703 = vmatpush1.msra.mxu0 0.0
    %1704 = vmatprep.subr.mxu0 0.0
    %1705 = vmatpush1.msra.mxu0 0.0
    %1706 = vmatprep.subr.mxu0 0.0
    %1707 = vmatpush1.msra.mxu0 0.0
    %1708 = vmatprep.subr.mxu0 0.0
    %1709 = vmatpush1.msra.mxu0 0.0
    %1710 = vmatprep.subr.mxu0 0.0
    %1711 = vmatpush1.msra.mxu0 0.0
    %1712 = vmatprep.subr.mxu0 0.0
    %1713 = vmatpush1.msra.mxu0 0.0
    %1714 = vmatprep.subr.mxu0 0.0
    %1715 = vmatpush1.msra.mxu0 0.0
    %1716 = vmatprep.subr.mxu0 0.0
    %1717 = vmatpush1.msra.mxu0 0.0
    %1718 = vmatprep.subr.mxu0 0.0
    %1719 = vmatpush1.msra.mxu0 0.0
    %1720 = vmatprep.subr.mxu0 0.0
    %1721 = vmatpush1.msra.mxu0 0.0
    %1722 = vmatprep.subr.mxu0 0.0
    %1723 = vmatpush1.msra.mxu0 0.0
    %1724 = vmatprep.subr.mxu0 0.0
    %1725 = vmatpush1.msra.mxu0 0.0
    %1726 = vmatprep.mubr.f32.mxu0 0.0
    %v1727 = vand.u32 %v1154, 4294901760
    %1728 = vmatmul.mubr.f32.gmra.mrb[0].mxu0 %v1727
    %v1729 = vpop.f32.mrb[0].mxu0
    %v1730 = vadd.f32 %v1645, %v1729
    %v1731 = vpop.f32.mrb[0].mxu0
    %1732 = vmatprep.mubr.f32.mxu0 0.0
    %v1733 = vand.u32 %v1157, 4294901760
    %1734 = vmatmul.mubr.f32.gmra.mrb[0].mxu0 %v1733
    %v1735 = vpop.f32.mrb[0].mxu0
    %v1736 = vadd.f32 %v1651, %v1735
    %v1737 = vpop.f32.mrb[0].mxu0
    %1738 = vdwg.mxu0
    %v1739 = vxor.u32 %v1730, 2147483648
    %v1740 = vxor.u32 %v1736, 2147483648
    %v1741 = vmul.f32 %v1739, 1.442695
    %v1742 = vpow.pop %v1741
    %v1743 = vmul.f32 %v1740, 1.442695
    %v1744 = vpow.pop %v1743
    %v1745 = vadd.f32 %v1742, 1.0
    %v1746 = vadd.f32 %v1744, 1.0
    %v1747 = vrcp.pop %v1745
    %v1748 = vmul.f32 1.0, %v1747
    %v1749 = vrcp.pop %v1746
    %v1750 = vmul.f32 1.0, %v1749
    %1751 = vst [vmem:[%s7] sm:$0xff] %v1748
    %1752 = vst [vmem:[%s7 + $0x8] sm:$0xff] %v1750
    // Predicated region
    $region42: #{fwd.1} parent=1 // pred_check
      _
    $region43: #{fwd.1} parent=1 // pred_check_branch
      %1754 = sbr.rel (0) target = $region45
    $region44: #{fwd.1} parent=1 // pred_region
      _
    $region45: #{fwd.1} parent=1 // pred_fallthru
      _
    // Predicated region
    $region46: #{fwd.1} parent=1 // pred_check
      _
    $region47: #{fwd.1} parent=1 // pred_check_branch
      %1756 = sbr.rel (0) target = $region49
    $region48: #{fwd.1} parent=1 // pred_region
      _
    $region49: #{fwd.1} parent=1 // pred_fallthru
      _
    %1757 = vsyncpa [#allocation3], 1
    %1758 = vsyncpa [#allocation5], 1

</llo_original>
